<compile_context>
chip_gen: v5e
topology: v5e:2x2
jax: 0.10.0
libtpu: 0.0.40
codegen_flags: <defaults>
</compile_context>

<pallas_src>
import jax
import jax.numpy as jnp
from jax import lax
from jax.experimental import pallas as pl
from jax.experimental.pallas import tpu as pltpu

# ---- model hyper-parameters (small, consistent with the module) ----
N_LAYERS = 2
D_MODEL = 32
N_HEADS = 4
D_DEPTH = D_MODEL // N_HEADS
D_FFWD = 64
VOCAB_SIZE = 50
VOCAB_PAD = 64            # pad vocab for a clean one-hot contraction
MAX_SEQ_LEN = 16
LN_EPS = 1e-6

BATCH = 2
SEQ = 8


def _layernorm(x, gamma, beta):
    mu = jnp.mean(x, axis=-1, keepdims=True)
    var = jnp.mean((x - mu) ** 2, axis=-1, keepdims=True)
    return (x - mu) * lax.rsqrt(var + LN_EPS) * gamma + beta


def _make_kernel(B, S):
    BS = B * S
    attn_scale = 1.0 / float(D_DEPTH) ** 0.5

    def kernel(
        tok_ref,    # (BS, 1) int32
        emb_ref,    # (VOCAB_PAD, D)   token embedding table, pre-scaled by d_rsqrt
        pos_ref,    # (L, BS, D)       positional slabs, replicated over B, pre-scaled
        mask_ref,   # (H*BS, BS)       additive cross-batch mask (0 / -1e9)
        qk_ref,     # (L, D, 2D)       [wq | wk], stored (in, out)
        wvc_ref,    # (L, D, H*D)      per-head wv_h @ wc_h, lane-dense
        w1_ref,     # (L, D, F)
        w2_ref,     # (L, F, D)
        vec_ref,    # (L, 6, 64)       ln1_g, ln1_b, ln2_g, ln2_b, b1, b2
        out_ref,    # (BS, D)
    ):
        # ---- token embedding: one-hot MXU matmul (table already scaled) ----
        one_hot = (tok_ref[...] ==
                   lax.broadcasted_iota(jnp.int32, (BS, VOCAB_PAD), 1)
                   ).astype(jnp.float32)                              # (BS, V)
        x = jnp.dot(one_hot, emb_ref[...],
                    preferred_element_type=jnp.float32)               # (BS, D)

        neg_mask = mask_ref[...]                                      # (H*BS, BS)

        for m in range(N_LAYERS):                  # static unroll over layers
            vecs = vec_ref[m]                      # (6, 64)
            ln1_g = vecs[0:1, :D_MODEL]
            ln1_b = vecs[1:2, :D_MODEL]
            ln2_g = vecs[2:3, :D_MODEL]
            ln2_b = vecs[3:4, :D_MODEL]
            b1 = vecs[4:5, :D_FFWD]
            b2 = vecs[5:6, :D_MODEL]

            x_embed = x + pos_ref[m]               # (BS, D)

            # ---- self-attention block ----
            xn = _layernorm(x_embed, ln1_g, ln1_b)
            qk = jnp.dot(xn, qk_ref[m],
                         preferred_element_type=jnp.float32)          # (BS, 2D)
            vc = jnp.dot(xn, wvc_ref[m],
                         preferred_element_type=jnp.float32)          # (BS, H*D)

            # per-head Q.K^T (NT form, no explicit transpose), stacked on sublanes
            logits = []
            for h in range(N_HEADS):               # static unroll over heads
                lo = h * D_DEPTH
                qh = qk[:, lo:lo + D_DEPTH]
                kh = qk[:, D_MODEL + lo:D_MODEL + lo + D_DEPTH]
                logits.append(
                    lax.dot_general(qh, kh, (((1,), (1,)), ((), ())),
                                    preferred_element_type=jnp.float32)
                    * attn_scale)
            logits = jnp.concatenate(logits, axis=0) + neg_mask       # (H*BS, BS)

            # one batched softmax for all heads (exact divide for parity)
            logits = logits - jnp.max(logits, axis=-1, keepdims=True)
            p = jnp.exp(logits)
            p = p / jnp.sum(p, axis=-1, keepdims=True)

            # P @ (V @ Wc) accumulated per head (== concat-heads then wc)
            attn = jnp.zeros((BS, D_MODEL), jnp.float32)
            for h in range(N_HEADS):
                ph = p[h * BS:(h + 1) * BS, :]                        # (BS, BS)
                vch = vc[:, h * D_MODEL:(h + 1) * D_MODEL]            # (BS, D)
                attn = attn + jnp.dot(ph, vch,
                                      preferred_element_type=jnp.float32)

            res1 = x_embed + attn

            # ---- feed-forward block ----
            xn2 = _layernorm(res1, ln2_g, ln2_b)
            hdn = jnp.dot(xn2, w1_ref[m],
                          preferred_element_type=jnp.float32) + b1
            hdn = jnp.maximum(hdn, 0.0)
            ff = jnp.dot(hdn, w2_ref[m],
                         preferred_element_type=jnp.float32) + b2
            x = res1 + ff

        out_ref[...] = x

    return kernel


def _encoder_pallas(tokens_col, packed, B, S):
    BS = B * S
    kernel = _make_kernel(B, S)

    operands = (tokens_col, packed["emb"], packed["pos"], packed["mask"],
                packed["qk"], packed["wvc"], packed["w1"], packed["w2"],
                packed["vecs"])

    def full(arr):
        nd = arr.ndim
        return pl.BlockSpec(arr.shape, lambda i, _nd=nd: (0,) * _nd)

    return pl.pallas_call(
        kernel,
        out_shape=jax.ShapeDtypeStruct((BS, D_MODEL), jnp.float32),
        grid_spec=pltpu.PrefetchScalarGridSpec(
            num_scalar_prefetch=0,
            grid=(1,),
            in_specs=[full(a) for a in operands],
            out_specs=pl.BlockSpec((BS, D_MODEL), lambda i: (0, 0)),
        ),
        compiler_params=pltpu.CompilerParams(
            dimension_semantics=("arbitrary",),
        ),
    )(*operands)


@jax.jit
def encoder_forward(tokens, packed):
    """tokens: (B, S) int32.  Eval-mode (training=False) Encoder forward."""
    B, S = tokens.shape
    tokens_col = tokens.reshape(B * S, 1).astype(jnp.int32)
    out_flat = _encoder_pallas(tokens_col, packed, B, S)
    return out_flat.reshape(B, S, D_MODEL)


def init_params(key):
    """Deterministic synthetic parameters (shapes match the PyTorch module)."""
    keys = iter(jax.random.split(key, 64))
    nrm = lambda shape, scale=0.05: (
        scale * jax.random.normal(next(keys), shape, dtype=jnp.float32)
    )

    params = {
        "enc_embed": nrm((VOCAB_SIZE, D_MODEL), 1.0),
        "pos_embed": [nrm((MAX_SEQ_LEN, D_MODEL), 1.0) for _ in range(N_LAYERS)],
        "layers": [],
    }
    for _ in range(N_LAYERS):
        params["layers"].append({
            "ln1_g": jnp.ones((1, D_MODEL), jnp.float32),
            "ln1_b": jnp.zeros((1, D_MODEL), jnp.float32),
            # Linear weights stored as (in, out) == PyTorch weight.T
            "wq": nrm((D_MODEL, D_MODEL)),
            "wk": nrm((D_MODEL, D_MODEL)),
            "wv": nrm((D_MODEL, D_MODEL)),
            "wc": nrm((D_MODEL, D_MODEL)),
            "ln2_g": jnp.ones((1, D_MODEL), jnp.float32),
            "ln2_b": jnp.zeros((1, D_MODEL), jnp.float32),
            "w1": nrm((D_MODEL, D_FFWD)),
            "b1": nrm((1, D_FFWD)),
            "w2": nrm((D_FFWD, D_MODEL)),
            "b2": nrm((1, D_MODEL)),
        })
    return params


def pack_params(params, B, S):
    """One-time host-side packing of module parameters into kernel slabs."""
    d_rsqrt = 1.0 / float(D_MODEL) ** 0.5
    BS = B * S

    # embedding table pre-scaled by d_rsqrt, vocab padded for clean contraction
    emb = params["enc_embed"] * d_rsqrt
    emb = jnp.pad(emb, ((0, VOCAB_PAD - VOCAB_SIZE), (0, 0)))          # (V_pad, D)

    # positional slabs: replicated over batch, pre-scaled by d_rsqrt
    pos = jnp.stack([
        jnp.tile(pe[:S, :] * d_rsqrt, (B, 1)) for pe in params["pos_embed"]
    ])                                                                 # (L, BS, D)

    # additive mask blocking cross-batch attention, tiled over heads
    row_b = jnp.arange(BS) // S
    base_mask = jnp.where(row_b[:, None] == row_b[None, :],
                          0.0, -1e9).astype(jnp.float32)               # (BS, BS)
    mask = jnp.tile(base_mask, (N_HEADS, 1))                           # (H*BS, BS)

    def pad64(v):
        v = v.reshape(1, -1)
        return jnp.pad(v, ((0, 0), (0, 64 - v.shape[1])))

    qk = jnp.stack([
        jnp.concatenate([lp["wq"], lp["wk"]], axis=1)
        for lp in params["layers"]
    ])                                                                 # (L, D, 2D)

    def fold_wvc(lp):
        slabs = []
        for h in range(N_HEADS):
            lo = h * D_DEPTH
            slabs.append(lp["wv"][:, lo:lo + D_DEPTH]
                         @ lp["wc"][lo:lo + D_DEPTH, :])               # (D, D)
        return jnp.concatenate(slabs, axis=1)                          # (D, H*D)

    wvc = jnp.stack([fold_wvc(lp) for lp in params["layers"]])         # (L, D, H*D)

    w1 = jnp.stack([lp["w1"] for lp in params["layers"]])              # (L, D, F)
    w2 = jnp.stack([lp["w2"] for lp in params["layers"]])              # (L, F, D)
    vecs = jnp.stack([
        jnp.concatenate([
            pad64(lp["ln1_g"]), pad64(lp["ln1_b"]),
            pad64(lp["ln2_g"]), pad64(lp["ln2_b"]),
            pad64(lp["b1"]), pad64(lp["b2"]),
        ], axis=0)
        for lp in params["layers"]
    ])                                                                 # (L, 6, 64)

    return {"emb": emb, "pos": pos, "mask": mask, "qk": qk, "wvc": wvc,
            "w1": w1, "w2": w2, "vecs": vecs}


if __name__ == "__main__":
    key = jax.random.PRNGKey(0)
    pkey, tkey = jax.random.split(key)
    params = init_params(pkey)
    packed = pack_params(params, BATCH, SEQ)
    tokens = jax.random.randint(tkey, (BATCH, SEQ), 0, VOCAB_SIZE, dtype=jnp.int32)

    out = encoder_forward(tokens, packed)
    jax.block_until_ready(out)
    assert out.shape == (BATCH, SEQ, D_MODEL)
    assert bool(jnp.all(jnp.isfinite(out)))
    print("KERNEL_OK")
</pallas_src>

<mosaic_0001>
module attributes {stable_mosaic.version = 11 : i64} {
  func.func @kernel(%arg0: i32, %arg1: memref<16x1xi32, #tpu.memory_space<vmem>>, %arg2: memref<64x32xf32, #tpu.memory_space<vmem>>, %arg3: memref<2x16x32xf32, #tpu.memory_space<vmem>>, %arg4: memref<64x16xf32, #tpu.memory_space<vmem>>, %arg5: memref<2x32x64xf32, #tpu.memory_space<vmem>>, %arg6: memref<2x32x128xf32, #tpu.memory_space<vmem>>, %arg7: memref<2x32x64xf32, #tpu.memory_space<vmem>>, %arg8: memref<2x64x32xf32, #tpu.memory_space<vmem>>, %arg9: memref<2x6x64xf32, #tpu.memory_space<vmem>>, %arg10: memref<16x32xf32, #tpu.memory_space<vmem>>) attributes {dimension_semantics = [#tpu.dimension_semantics<arbitrary>], iteration_bounds = array<i64: 1>, scalar_prefetch = 0 : i64, scratch_operands = 0 : i64, tpu.core_type = #tpu.core_type<tc>, window_params = [{pipeline_mode = #tpu.pipeline_mode<synchronous>, transform_indices = @transform_0, window_bounds = array<i64: 16, 1>}, {pipeline_mode = #tpu.pipeline_mode<synchronous>, transform_indices = @transform_1, window_bounds = array<i64: 64, 32>}, {pipeline_mode = #tpu.pipeline_mode<synchronous>, transform_indices = @transform_2, window_bounds = array<i64: 2, 16, 32>}, {pipeline_mode = #tpu.pipeline_mode<synchronous>, transform_indices = @transform_3, window_bounds = array<i64: 64, 16>}, {pipeline_mode = #tpu.pipeline_mode<synchronous>, transform_indices = @transform_4, window_bounds = array<i64: 2, 32, 64>}, {pipeline_mode = #tpu.pipeline_mode<synchronous>, transform_indices = @transform_5, window_bounds = array<i64: 2, 32, 128>}, {pipeline_mode = #tpu.pipeline_mode<synchronous>, transform_indices = @transform_6, window_bounds = array<i64: 2, 32, 64>}, {pipeline_mode = #tpu.pipeline_mode<synchronous>, transform_indices = @transform_7, window_bounds = array<i64: 2, 64, 32>}, {pipeline_mode = #tpu.pipeline_mode<synchronous>, transform_indices = @transform_8, window_bounds = array<i64: 2, 6, 64>}, {pipeline_mode = #tpu.pipeline_mode<synchronous>, transform_indices = @transform_9, window_bounds = array<i64: 16, 32>}]} {
    %c0 = arith.constant 0 : index
    %c0_0 = arith.constant 0 : index
    %0 = vector.load %arg1[%c0, %c0_0] : memref<16x1xi32, #tpu.memory_space<vmem>>, vector<16x1xi32>
    %1 = tpu.iota {dimensions = array<i32: 1>} : vector<16x64xi32>
    %2 = vector.broadcast %0 : vector<16x1xi32> to vector<16x64xi32>
    %3 = arith.cmpi eq, %2, %1 : vector<16x64xi32>
    %4 = arith.extui %3 : vector<16x64xi1> to vector<16x64xi32>
    %5 = arith.sitofp %4 : vector<16x64xi32> to vector<16x64xf32>
    %c0_1 = arith.constant 0 : index
    %c0_2 = arith.constant 0 : index
    %6 = vector.load %arg2[%c0_1, %c0_2] : memref<64x32xf32, #tpu.memory_space<vmem>>, vector<64x32xf32>
    %cst = arith.constant dense<0.000000e+00> : vector<16x32xf32>
    %7 = tpu.matmul %5, %6, %cst {dimension_numbers = #tpu.dot_dimension_numbers<[1], [0], [0], [1], [0, 0, 1, 1], [], []>} : vector<16x64xf32>, vector<64x32xf32>, vector<16x32xf32> -> vector<16x32xf32>
    %c0_3 = arith.constant 0 : index
    %c0_4 = arith.constant 0 : index
    %8 = vector.load %arg4[%c0_3, %c0_4] : memref<64x16xf32, #tpu.memory_space<vmem>>, vector<64x16xf32>
    %c0_5 = arith.constant 0 : index
    %c0_6 = arith.constant 0 : index
    %c0_7 = arith.constant 0 : index
    %9 = vector.load %arg9[%c0_5, %c0_6, %c0_7] : memref<2x6x64xf32, #tpu.memory_space<vmem>>, vector<1x6x64xf32>
    %10 = vector.shape_cast %9 : vector<1x6x64xf32> to vector<6x64xf32>
    %11 = vector.extract_strided_slice %10 {offsets = [0, 0], sizes = [1, 32], strides = [1, 1]} : vector<6x64xf32> to vector<1x32xf32>
    %12 = vector.extract_strided_slice %10 {offsets = [1, 0], sizes = [1, 32], strides = [1, 1]} : vector<6x64xf32> to vector<1x32xf32>
    %13 = vector.extract_strided_slice %10 {offsets = [2, 0], sizes = [1, 32], strides = [1, 1]} : vector<6x64xf32> to vector<1x32xf32>
    %14 = vector.extract_strided_slice %10 {offsets = [3, 0], sizes = [1, 32], strides = [1, 1]} : vector<6x64xf32> to vector<1x32xf32>
    %15 = vector.extract_strided_slice %10 {offsets = [4, 0], sizes = [1, 64], strides = [1, 1]} : vector<6x64xf32> to vector<1x64xf32>
    %16 = vector.extract_strided_slice %10 {offsets = [5, 0], sizes = [1, 32], strides = [1, 1]} : vector<6x64xf32> to vector<1x32xf32>
    %c0_8 = arith.constant 0 : index
    %c0_9 = arith.constant 0 : index
    %c0_10 = arith.constant 0 : index
    %17 = vector.load %arg3[%c0_8, %c0_9, %c0_10] : memref<2x16x32xf32, #tpu.memory_space<vmem>>, vector<1x16x32xf32>
    %18 = vector.shape_cast %17 : vector<1x16x32xf32> to vector<16x32xf32>
    %19 = arith.addf %7, %18 : vector<16x32xf32>
    %cst_11 = arith.constant dense<0.000000e+00> : vector<16xf32>
    %20 = vector.multi_reduction <add>, %19, %cst_11 [1] : vector<16x32xf32> to vector<16xf32>
    %21 = vector.shape_cast %20 : vector<16xf32> to vector<16x1xf32>
    %cst_12 = arith.constant 3.200000e+01 : f32
    %22 = vector.broadcast %cst_12 : f32 to vector<16x1xf32>
    %23 = arith.divf %21, %22 : vector<16x1xf32>
    %24 = vector.broadcast %23 : vector<16x1xf32> to vector<16x32xf32>
    %25 = arith.subf %19, %24 : vector<16x32xf32>
    %26 = arith.mulf %25, %25 : vector<16x32xf32>
    %cst_13 = arith.constant dense<0.000000e+00> : vector<16xf32>
    %27 = vector.multi_reduction <add>, %26, %cst_13 [1] : vector<16x32xf32> to vector<16xf32>
    %28 = vector.shape_cast %27 : vector<16xf32> to vector<16x1xf32>
    %cst_14 = arith.constant 3.200000e+01 : f32
    %29 = vector.broadcast %cst_14 : f32 to vector<16x1xf32>
    %30 = arith.divf %28, %29 : vector<16x1xf32>
    %31 = vector.broadcast %23 : vector<16x1xf32> to vector<16x32xf32>
    %32 = arith.subf %19, %31 : vector<16x32xf32>
    %cst_15 = arith.constant 9.99999997E-7 : f32
    %33 = vector.broadcast %cst_15 : f32 to vector<16x1xf32>
    %34 = arith.addf %30, %33 : vector<16x1xf32>
    %35 = math.rsqrt %34 : vector<16x1xf32>
    %36 = vector.broadcast %35 : vector<16x1xf32> to vector<16x32xf32>
    %37 = arith.mulf %32, %36 : vector<16x32xf32>
    %38 = vector.broadcast %11 : vector<1x32xf32> to vector<16x32xf32>
    %39 = arith.mulf %37, %38 : vector<16x32xf32>
    %40 = vector.broadcast %12 : vector<1x32xf32> to vector<16x32xf32>
    %41 = arith.addf %39, %40 : vector<16x32xf32>
    %c0_16 = arith.constant 0 : index
    %c0_17 = arith.constant 0 : index
    %c0_18 = arith.constant 0 : index
    %42 = vector.load %arg5[%c0_16, %c0_17, %c0_18] : memref<2x32x64xf32, #tpu.memory_space<vmem>>, vector<1x32x64xf32>
    %43 = vector.shape_cast %42 : vector<1x32x64xf32> to vector<32x64xf32>
    %cst_19 = arith.constant dense<0.000000e+00> : vector<16x64xf32>
    %44 = tpu.matmul %41, %43, %cst_19 {dimension_numbers = #tpu.dot_dimension_numbers<[1], [0], [0], [1], [0, 0, 1, 1], [], []>} : vector<16x32xf32>, vector<32x64xf32>, vector<16x64xf32> -> vector<16x64xf32>
    %c0_20 = arith.constant 0 : index
    %c0_21 = arith.constant 0 : index
    %c0_22 = arith.constant 0 : index
    %45 = vector.load %arg6[%c0_20, %c0_21, %c0_22] : memref<2x32x128xf32, #tpu.memory_space<vmem>>, vector<1x32x128xf32>
    %46 = vector.shape_cast %45 : vector<1x32x128xf32> to vector<32x128xf32>
    %cst_23 = arith.constant dense<0.000000e+00> : vector<16x128xf32>
    %47 = tpu.matmul %41, %46, %cst_23 {dimension_numbers = #tpu.dot_dimension_numbers<[1], [0], [0], [1], [0, 0, 1, 1], [], []>} : vector<16x32xf32>, vector<32x128xf32>, vector<16x128xf32> -> vector<16x128xf32>
    %48 = vector.extract_strided_slice %44 {offsets = [0, 0], sizes = [16, 8], strides = [1, 1]} : vector<16x64xf32> to vector<16x8xf32>
    %49 = vector.extract_strided_slice %44 {offsets = [0, 32], sizes = [16, 8], strides = [1, 1]} : vector<16x64xf32> to vector<16x8xf32>
    %cst_24 = arith.constant dense<0.000000e+00> : vector<16x16xf32>
    %50 = tpu.matmul %48, %49, %cst_24 {dimension_numbers = #tpu.dot_dimension_numbers<[1], [1], [0], [0], [0, 0, 1, 0], [], []>} : vector<16x8xf32>, vector<16x8xf32>, vector<16x16xf32> -> vector<16x16xf32>
    %cst_25 = arith.constant 0.353553385 : f32
    %51 = vector.broadcast %cst_25 : f32 to vector<16x16xf32>
    %52 = arith.mulf %50, %51 : vector<16x16xf32>
    %53 = vector.extract_strided_slice %44 {offsets = [0, 8], sizes = [16, 8], strides = [1, 1]} : vector<16x64xf32> to vector<16x8xf32>
    %54 = vector.extract_strided_slice %44 {offsets = [0, 40], sizes = [16, 8], strides = [1, 1]} : vector<16x64xf32> to vector<16x8xf32>
    %cst_26 = arith.constant dense<0.000000e+00> : vector<16x16xf32>
    %55 = tpu.matmul %53, %54, %cst_26 {dimension_numbers = #tpu.dot_dimension_numbers<[1], [1], [0], [0], [0, 0, 1, 0], [], []>} : vector<16x8xf32>, vector<16x8xf32>, vector<16x16xf32> -> vector<16x16xf32>
    %cst_27 = arith.constant 0.353553385 : f32
    %56 = vector.broadcast %cst_27 : f32 to vector<16x16xf32>
    %57 = arith.mulf %55, %56 : vector<16x16xf32>
    %58 = vector.extract_strided_slice %44 {offsets = [0, 16], sizes = [16, 8], strides = [1, 1]} : vector<16x64xf32> to vector<16x8xf32>
    %59 = vector.extract_strided_slice %44 {offsets = [0, 48], sizes = [16, 8], strides = [1, 1]} : vector<16x64xf32> to vector<16x8xf32>
    %cst_28 = arith.constant dense<0.000000e+00> : vector<16x16xf32>
    %60 = tpu.matmul %58, %59, %cst_28 {dimension_numbers = #tpu.dot_dimension_numbers<[1], [1], [0], [0], [0, 0, 1, 0], [], []>} : vector<16x8xf32>, vector<16x8xf32>, vector<16x16xf32> -> vector<16x16xf32>
    %cst_29 = arith.constant 0.353553385 : f32
    %61 = vector.broadcast %cst_29 : f32 to vector<16x16xf32>
    %62 = arith.mulf %60, %61 : vector<16x16xf32>
    %63 = vector.extract_strided_slice %44 {offsets = [0, 24], sizes = [16, 8], strides = [1, 1]} : vector<16x64xf32> to vector<16x8xf32>
    %64 = vector.extract_strided_slice %44 {offsets = [0, 56], sizes = [16, 8], strides = [1, 1]} : vector<16x64xf32> to vector<16x8xf32>
    %cst_30 = arith.constant dense<0.000000e+00> : vector<16x16xf32>
    %65 = tpu.matmul %63, %64, %cst_30 {dimension_numbers = #tpu.dot_dimension_numbers<[1], [1], [0], [0], [0, 0, 1, 0], [], []>} : vector<16x8xf32>, vector<16x8xf32>, vector<16x16xf32> -> vector<16x16xf32>
    %cst_31 = arith.constant 0.353553385 : f32
    %66 = vector.broadcast %cst_31 : f32 to vector<16x16xf32>
    %67 = arith.mulf %65, %66 : vector<16x16xf32>
    %68 = tpu.concatenate %52, %57, %62, %67 in 0 : vector<16x16xf32>, vector<16x16xf32>, vector<16x16xf32>, vector<16x16xf32> -> vector<64x16xf32>
    %69 = arith.addf %68, %8 : vector<64x16xf32>
    %cst_32 = arith.constant dense<0xFF800000> : vector<64xf32>
    %70 = vector.multi_reduction <maximumf>, %69, %cst_32 [1] : vector<64x16xf32> to vector<64xf32>
    %71 = vector.shape_cast %70 : vector<64xf32> to vector<64x1xf32>
    %72 = vector.broadcast %71 : vector<64x1xf32> to vector<64x16xf32>
    %73 = arith.subf %69, %72 : vector<64x16xf32>
    %74 = math.exp %73 : vector<64x16xf32>
    %cst_33 = arith.constant dense<0.000000e+00> : vector<64xf32>
    %75 = vector.multi_reduction <add>, %74, %cst_33 [1] : vector<64x16xf32> to vector<64xf32>
    %76 = vector.shape_cast %75 : vector<64xf32> to vector<64x1xf32>
    %77 = vector.broadcast %76 : vector<64x1xf32> to vector<64x16xf32>
    %78 = arith.divf %74, %77 : vector<64x16xf32>
    %cst_34 = arith.constant 0.000000e+00 : f32
    %79 = vector.broadcast %cst_34 : f32 to vector<16x32xf32>
    %80 = vector.extract_strided_slice %78 {offsets = [0, 0], sizes = [16, 16], strides = [1, 1]} : vector<64x16xf32> to vector<16x16xf32>
    %81 = vector.extract_strided_slice %47 {offsets = [0, 0], sizes = [16, 32], strides = [1, 1]} : vector<16x128xf32> to vector<16x32xf32>
    %cst_35 = arith.constant dense<0.000000e+00> : vector<16x32xf32>
    %82 = tpu.matmul %80, %81, %cst_35 {dimension_numbers = #tpu.dot_dimension_numbers<[1], [0], [0], [1], [0, 0, 1, 1], [], []>} : vector<16x16xf32>, vector<16x32xf32>, vector<16x32xf32> -> vector<16x32xf32>
    %83 = arith.addf %79, %82 : vector<16x32xf32>
    %84 = vector.extract_strided_slice %78 {offsets = [16, 0], sizes = [16, 16], strides = [1, 1]} : vector<64x16xf32> to vector<16x16xf32>
    %85 = vector.extract_strided_slice %47 {offsets = [0, 32], sizes = [16, 32], strides = [1, 1]} : vector<16x128xf32> to vector<16x32xf32>
    %cst_36 = arith.constant dense<0.000000e+00> : vector<16x32xf32>
    %86 = tpu.matmul %84, %85, %cst_36 {dimension_numbers = #tpu.dot_dimension_numbers<[1], [0], [0], [1], [0, 0, 1, 1], [], []>} : vector<16x16xf32>, vector<16x32xf32>, vector<16x32xf32> -> vector<16x32xf32>
    %87 = arith.addf %83, %86 : vector<16x32xf32>
    %88 = vector.extract_strided_slice %78 {offsets = [32, 0], sizes = [16, 16], strides = [1, 1]} : vector<64x16xf32> to vector<16x16xf32>
    %89 = vector.extract_strided_slice %47 {offsets = [0, 64], sizes = [16, 32], strides = [1, 1]} : vector<16x128xf32> to vector<16x32xf32>
    %cst_37 = arith.constant dense<0.000000e+00> : vector<16x32xf32>
    %90 = tpu.matmul %88, %89, %cst_37 {dimension_numbers = #tpu.dot_dimension_numbers<[1], [0], [0], [1], [0, 0, 1, 1], [], []>} : vector<16x16xf32>, vector<16x32xf32>, vector<16x32xf32> -> vector<16x32xf32>
    %91 = arith.addf %87, %90 : vector<16x32xf32>
    %92 = vector.extract_strided_slice %78 {offsets = [48, 0], sizes = [16, 16], strides = [1, 1]} : vector<64x16xf32> to vector<16x16xf32>
    %93 = vector.extract_strided_slice %47 {offsets = [0, 96], sizes = [16, 32], strides = [1, 1]} : vector<16x128xf32> to vector<16x32xf32>
    %cst_38 = arith.constant dense<0.000000e+00> : vector<16x32xf32>
    %94 = tpu.matmul %92, %93, %cst_38 {dimension_numbers = #tpu.dot_dimension_numbers<[1], [0], [0], [1], [0, 0, 1, 1], [], []>} : vector<16x16xf32>, vector<16x32xf32>, vector<16x32xf32> -> vector<16x32xf32>
    %95 = arith.addf %91, %94 : vector<16x32xf32>
    %96 = arith.addf %19, %95 : vector<16x32xf32>
    %cst_39 = arith.constant dense<0.000000e+00> : vector<16xf32>
    %97 = vector.multi_reduction <add>, %96, %cst_39 [1] : vector<16x32xf32> to vector<16xf32>
    %98 = vector.shape_cast %97 : vector<16xf32> to vector<16x1xf32>
    %cst_40 = arith.constant 3.200000e+01 : f32
    %99 = vector.broadcast %cst_40 : f32 to vector<16x1xf32>
    %100 = arith.divf %98, %99 : vector<16x1xf32>
    %101 = vector.broadcast %100 : vector<16x1xf32> to vector<16x32xf32>
    %102 = arith.subf %96, %101 : vector<16x32xf32>
    %103 = arith.mulf %102, %102 : vector<16x32xf32>
    %cst_41 = arith.constant dense<0.000000e+00> : vector<16xf32>
    %104 = vector.multi_reduction <add>, %103, %cst_41 [1] : vector<16x32xf32> to vector<16xf32>
    %105 = vector.shape_cast %104 : vector<16xf32> to vector<16x1xf32>
    %cst_42 = arith.constant 3.200000e+01 : f32
    %106 = vector.broadcast %cst_42 : f32 to vector<16x1xf32>
    %107 = arith.divf %105, %106 : vector<16x1xf32>
    %108 = vector.broadcast %100 : vector<16x1xf32> to vector<16x32xf32>
    %109 = arith.subf %96, %108 : vector<16x32xf32>
    %cst_43 = arith.constant 9.99999997E-7 : f32
    %110 = vector.broadcast %cst_43 : f32 to vector<16x1xf32>
    %111 = arith.addf %107, %110 : vector<16x1xf32>
    %112 = math.rsqrt %111 : vector<16x1xf32>
    %113 = vector.broadcast %112 : vector<16x1xf32> to vector<16x32xf32>
    %114 = arith.mulf %109, %113 : vector<16x32xf32>
    %115 = vector.broadcast %13 : vector<1x32xf32> to vector<16x32xf32>
    %116 = arith.mulf %114, %115 : vector<16x32xf32>
    %117 = vector.broadcast %14 : vector<1x32xf32> to vector<16x32xf32>
    %118 = arith.addf %116, %117 : vector<16x32xf32>
    %c0_44 = arith.constant 0 : index
    %c0_45 = arith.constant 0 : index
    %c0_46 = arith.constant 0 : index
    %119 = vector.load %arg7[%c0_44, %c0_45, %c0_46] : memref<2x32x64xf32, #tpu.memory_space<vmem>>, vector<1x32x64xf32>
    %120 = vector.shape_cast %119 : vector<1x32x64xf32> to vector<32x64xf32>
    %cst_47 = arith.constant dense<0.000000e+00> : vector<16x64xf32>
    %121 = tpu.matmul %118, %120, %cst_47 {dimension_numbers = #tpu.dot_dimension_numbers<[1], [0], [0], [1], [0, 0, 1, 1], [], []>} : vector<16x32xf32>, vector<32x64xf32>, vector<16x64xf32> -> vector<16x64xf32>
    %122 = vector.broadcast %15 : vector<1x64xf32> to vector<16x64xf32>
    %123 = arith.addf %121, %122 : vector<16x64xf32>
    %cst_48 = arith.constant 0.000000e+00 : f32
    %124 = vector.broadcast %cst_48 : f32 to vector<16x64xf32>
    %125 = arith.maximumf %123, %124 : vector<16x64xf32>
    %c0_49 = arith.constant 0 : index
    %c0_50 = arith.constant 0 : index
    %c0_51 = arith.constant 0 : index
    %126 = vector.load %arg8[%c0_49, %c0_50, %c0_51] : memref<2x64x32xf32, #tpu.memory_space<vmem>>, vector<1x64x32xf32>
    %127 = vector.shape_cast %126 : vector<1x64x32xf32> to vector<64x32xf32>
    %cst_52 = arith.constant dense<0.000000e+00> : vector<16x32xf32>
    %128 = tpu.matmul %125, %127, %cst_52 {dimension_numbers = #tpu.dot_dimension_numbers<[1], [0], [0], [1], [0, 0, 1, 1], [], []>} : vector<16x64xf32>, vector<64x32xf32>, vector<16x32xf32> -> vector<16x32xf32>
    %129 = vector.broadcast %16 : vector<1x32xf32> to vector<16x32xf32>
    %130 = arith.addf %128, %129 : vector<16x32xf32>
    %131 = arith.addf %96, %130 : vector<16x32xf32>
    %c1 = arith.constant 1 : index
    %c0_53 = arith.constant 0 : index
    %c0_54 = arith.constant 0 : index
    %132 = vector.load %arg9[%c1, %c0_53, %c0_54] : memref<2x6x64xf32, #tpu.memory_space<vmem>>, vector<1x6x64xf32>
    %133 = vector.shape_cast %132 : vector<1x6x64xf32> to vector<6x64xf32>
    %134 = vector.extract_strided_slice %133 {offsets = [0, 0], sizes = [1, 32], strides = [1, 1]} : vector<6x64xf32> to vector<1x32xf32>
    %135 = vector.extract_strided_slice %133 {offsets = [1, 0], sizes = [1, 32], strides = [1, 1]} : vector<6x64xf32> to vector<1x32xf32>
    %136 = vector.extract_strided_slice %133 {offsets = [2, 0], sizes = [1, 32], strides = [1, 1]} : vector<6x64xf32> to vector<1x32xf32>
    %137 = vector.extract_strided_slice %133 {offsets = [3, 0], sizes = [1, 32], strides = [1, 1]} : vector<6x64xf32> to vector<1x32xf32>
    %138 = vector.extract_strided_slice %133 {offsets = [4, 0], sizes = [1, 64], strides = [1, 1]} : vector<6x64xf32> to vector<1x64xf32>
    %139 = vector.extract_strided_slice %133 {offsets = [5, 0], sizes = [1, 32], strides = [1, 1]} : vector<6x64xf32> to vector<1x32xf32>
    %c1_55 = arith.constant 1 : index
    %c0_56 = arith.constant 0 : index
    %c0_57 = arith.constant 0 : index
    %140 = vector.load %arg3[%c1_55, %c0_56, %c0_57] : memref<2x16x32xf32, #tpu.memory_space<vmem>>, vector<1x16x32xf32>
    %141 = vector.shape_cast %140 : vector<1x16x32xf32> to vector<16x32xf32>
    %142 = arith.addf %131, %141 : vector<16x32xf32>
    %cst_58 = arith.constant dense<0.000000e+00> : vector<16xf32>
    %143 = vector.multi_reduction <add>, %142, %cst_58 [1] : vector<16x32xf32> to vector<16xf32>
    %144 = vector.shape_cast %143 : vector<16xf32> to vector<16x1xf32>
    %cst_59 = arith.constant 3.200000e+01 : f32
    %145 = vector.broadcast %cst_59 : f32 to vector<16x1xf32>
    %146 = arith.divf %144, %145 : vector<16x1xf32>
    %147 = vector.broadcast %146 : vector<16x1xf32> to vector<16x32xf32>
    %148 = arith.subf %142, %147 : vector<16x32xf32>
    %149 = arith.mulf %148, %148 : vector<16x32xf32>
    %cst_60 = arith.constant dense<0.000000e+00> : vector<16xf32>
    %150 = vector.multi_reduction <add>, %149, %cst_60 [1] : vector<16x32xf32> to vector<16xf32>
    %151 = vector.shape_cast %150 : vector<16xf32> to vector<16x1xf32>
    %cst_61 = arith.constant 3.200000e+01 : f32
    %152 = vector.broadcast %cst_61 : f32 to vector<16x1xf32>
    %153 = arith.divf %151, %152 : vector<16x1xf32>
    %154 = vector.broadcast %146 : vector<16x1xf32> to vector<16x32xf32>
    %155 = arith.subf %142, %154 : vector<16x32xf32>
    %cst_62 = arith.constant 9.99999997E-7 : f32
    %156 = vector.broadcast %cst_62 : f32 to vector<16x1xf32>
    %157 = arith.addf %153, %156 : vector<16x1xf32>
    %158 = math.rsqrt %157 : vector<16x1xf32>
    %159 = vector.broadcast %158 : vector<16x1xf32> to vector<16x32xf32>
    %160 = arith.mulf %155, %159 : vector<16x32xf32>
    %161 = vector.broadcast %134 : vector<1x32xf32> to vector<16x32xf32>
    %162 = arith.mulf %160, %161 : vector<16x32xf32>
    %163 = vector.broadcast %135 : vector<1x32xf32> to vector<16x32xf32>
    %164 = arith.addf %162, %163 : vector<16x32xf32>
    %c1_63 = arith.constant 1 : index
    %c0_64 = arith.constant 0 : index
    %c0_65 = arith.constant 0 : index
    %165 = vector.load %arg5[%c1_63, %c0_64, %c0_65] : memref<2x32x64xf32, #tpu.memory_space<vmem>>, vector<1x32x64xf32>
    %166 = vector.shape_cast %165 : vector<1x32x64xf32> to vector<32x64xf32>
    %cst_66 = arith.constant dense<0.000000e+00> : vector<16x64xf32>
    %167 = tpu.matmul %164, %166, %cst_66 {dimension_numbers = #tpu.dot_dimension_numbers<[1], [0], [0], [1], [0, 0, 1, 1], [], []>} : vector<16x32xf32>, vector<32x64xf32>, vector<16x64xf32> -> vector<16x64xf32>
    %c1_67 = arith.constant 1 : index
    %c0_68 = arith.constant 0 : index
    %c0_69 = arith.constant 0 : index
    %168 = vector.load %arg6[%c1_67, %c0_68, %c0_69] : memref<2x32x128xf32, #tpu.memory_space<vmem>>, vector<1x32x128xf32>
    %169 = vector.shape_cast %168 : vector<1x32x128xf32> to vector<32x128xf32>
    %cst_70 = arith.constant dense<0.000000e+00> : vector<16x128xf32>
    %170 = tpu.matmul %164, %169, %cst_70 {dimension_numbers = #tpu.dot_dimension_numbers<[1], [0], [0], [1], [0, 0, 1, 1], [], []>} : vector<16x32xf32>, vector<32x128xf32>, vector<16x128xf32> -> vector<16x128xf32>
    %171 = vector.extract_strided_slice %167 {offsets = [0, 0], sizes = [16, 8], strides = [1, 1]} : vector<16x64xf32> to vector<16x8xf32>
    %172 = vector.extract_strided_slice %167 {offsets = [0, 32], sizes = [16, 8], strides = [1, 1]} : vector<16x64xf32> to vector<16x8xf32>
    %cst_71 = arith.constant dense<0.000000e+00> : vector<16x16xf32>
    %173 = tpu.matmul %171, %172, %cst_71 {dimension_numbers = #tpu.dot_dimension_numbers<[1], [1], [0], [0], [0, 0, 1, 0], [], []>} : vector<16x8xf32>, vector<16x8xf32>, vector<16x16xf32> -> vector<16x16xf32>
    %cst_72 = arith.constant 0.353553385 : f32
    %174 = vector.broadcast %cst_72 : f32 to vector<16x16xf32>
    %175 = arith.mulf %173, %174 : vector<16x16xf32>
    %176 = vector.extract_strided_slice %167 {offsets = [0, 8], sizes = [16, 8], strides = [1, 1]} : vector<16x64xf32> to vector<16x8xf32>
    %177 = vector.extract_strided_slice %167 {offsets = [0, 40], sizes = [16, 8], strides = [1, 1]} : vector<16x64xf32> to vector<16x8xf32>
    %cst_73 = arith.constant dense<0.000000e+00> : vector<16x16xf32>
    %178 = tpu.matmul %176, %177, %cst_73 {dimension_numbers = #tpu.dot_dimension_numbers<[1], [1], [0], [0], [0, 0, 1, 0], [], []>} : vector<16x8xf32>, vector<16x8xf32>, vector<16x16xf32> -> vector<16x16xf32>
    %cst_74 = arith.constant 0.353553385 : f32
    %179 = vector.broadcast %cst_74 : f32 to vector<16x16xf32>
    %180 = arith.mulf %178, %179 : vector<16x16xf32>
    %181 = vector.extract_strided_slice %167 {offsets = [0, 16], sizes = [16, 8], strides = [1, 1]} : vector<16x64xf32> to vector<16x8xf32>
    %182 = vector.extract_strided_slice %167 {offsets = [0, 48], sizes = [16, 8], strides = [1, 1]} : vector<16x64xf32> to vector<16x8xf32>
    %cst_75 = arith.constant dense<0.000000e+00> : vector<16x16xf32>
    %183 = tpu.matmul %181, %182, %cst_75 {dimension_numbers = #tpu.dot_dimension_numbers<[1], [1], [0], [0], [0, 0, 1, 0], [], []>} : vector<16x8xf32>, vector<16x8xf32>, vector<16x16xf32> -> vector<16x16xf32>
    %cst_76 = arith.constant 0.353553385 : f32
    %184 = vector.broadcast %cst_76 : f32 to vector<16x16xf32>
    %185 = arith.mulf %183, %184 : vector<16x16xf32>
    %186 = vector.extract_strided_slice %167 {offsets = [0, 24], sizes = [16, 8], strides = [1, 1]} : vector<16x64xf32> to vector<16x8xf32>
    %187 = vector.extract_strided_slice %167 {offsets = [0, 56], sizes = [16, 8], strides = [1, 1]} : vector<16x64xf32> to vector<16x8xf32>
    %cst_77 = arith.constant dense<0.000000e+00> : vector<16x16xf32>
    %188 = tpu.matmul %186, %187, %cst_77 {dimension_numbers = #tpu.dot_dimension_numbers<[1], [1], [0], [0], [0, 0, 1, 0], [], []>} : vector<16x8xf32>, vector<16x8xf32>, vector<16x16xf32> -> vector<16x16xf32>
    %cst_78 = arith.constant 0.353553385 : f32
    %189 = vector.broadcast %cst_78 : f32 to vector<16x16xf32>
    %190 = arith.mulf %188, %189 : vector<16x16xf32>
    %191 = tpu.concatenate %175, %180, %185, %190 in 0 : vector<16x16xf32>, vector<16x16xf32>, vector<16x16xf32>, vector<16x16xf32> -> vector<64x16xf32>
    %192 = arith.addf %191, %8 : vector<64x16xf32>
    %cst_79 = arith.constant dense<0xFF800000> : vector<64xf32>
    %193 = vector.multi_reduction <maximumf>, %192, %cst_79 [1] : vector<64x16xf32> to vector<64xf32>
    %194 = vector.shape_cast %193 : vector<64xf32> to vector<64x1xf32>
    %195 = vector.broadcast %194 : vector<64x1xf32> to vector<64x16xf32>
    %196 = arith.subf %192, %195 : vector<64x16xf32>
    %197 = math.exp %196 : vector<64x16xf32>
    %cst_80 = arith.constant dense<0.000000e+00> : vector<64xf32>
    %198 = vector.multi_reduction <add>, %197, %cst_80 [1] : vector<64x16xf32> to vector<64xf32>
    %199 = vector.shape_cast %198 : vector<64xf32> to vector<64x1xf32>
    %200 = vector.broadcast %199 : vector<64x1xf32> to vector<64x16xf32>
    %201 = arith.divf %197, %200 : vector<64x16xf32>
    %cst_81 = arith.constant 0.000000e+00 : f32
    %202 = vector.broadcast %cst_81 : f32 to vector<16x32xf32>
    %203 = vector.extract_strided_slice %201 {offsets = [0, 0], sizes = [16, 16], strides = [1, 1]} : vector<64x16xf32> to vector<16x16xf32>
    %204 = vector.extract_strided_slice %170 {offsets = [0, 0], sizes = [16, 32], strides = [1, 1]} : vector<16x128xf32> to vector<16x32xf32>
    %cst_82 = arith.constant dense<0.000000e+00> : vector<16x32xf32>
    %205 = tpu.matmul %203, %204, %cst_82 {dimension_numbers = #tpu.dot_dimension_numbers<[1], [0], [0], [1], [0, 0, 1, 1], [], []>} : vector<16x16xf32>, vector<16x32xf32>, vector<16x32xf32> -> vector<16x32xf32>
    %206 = arith.addf %202, %205 : vector<16x32xf32>
    %207 = vector.extract_strided_slice %201 {offsets = [16, 0], sizes = [16, 16], strides = [1, 1]} : vector<64x16xf32> to vector<16x16xf32>
    %208 = vector.extract_strided_slice %170 {offsets = [0, 32], sizes = [16, 32], strides = [1, 1]} : vector<16x128xf32> to vector<16x32xf32>
    %cst_83 = arith.constant dense<0.000000e+00> : vector<16x32xf32>
    %209 = tpu.matmul %207, %208, %cst_83 {dimension_numbers = #tpu.dot_dimension_numbers<[1], [0], [0], [1], [0, 0, 1, 1], [], []>} : vector<16x16xf32>, vector<16x32xf32>, vector<16x32xf32> -> vector<16x32xf32>
    %210 = arith.addf %206, %209 : vector<16x32xf32>
    %211 = vector.extract_strided_slice %201 {offsets = [32, 0], sizes = [16, 16], strides = [1, 1]} : vector<64x16xf32> to vector<16x16xf32>
    %212 = vector.extract_strided_slice %170 {offsets = [0, 64], sizes = [16, 32], strides = [1, 1]} : vector<16x128xf32> to vector<16x32xf32>
    %cst_84 = arith.constant dense<0.000000e+00> : vector<16x32xf32>
    %213 = tpu.matmul %211, %212, %cst_84 {dimension_numbers = #tpu.dot_dimension_numbers<[1], [0], [0], [1], [0, 0, 1, 1], [], []>} : vector<16x16xf32>, vector<16x32xf32>, vector<16x32xf32> -> vector<16x32xf32>
    %214 = arith.addf %210, %213 : vector<16x32xf32>
    %215 = vector.extract_strided_slice %201 {offsets = [48, 0], sizes = [16, 16], strides = [1, 1]} : vector<64x16xf32> to vector<16x16xf32>
    %216 = vector.extract_strided_slice %170 {offsets = [0, 96], sizes = [16, 32], strides = [1, 1]} : vector<16x128xf32> to vector<16x32xf32>
    %cst_85 = arith.constant dense<0.000000e+00> : vector<16x32xf32>
    %217 = tpu.matmul %215, %216, %cst_85 {dimension_numbers = #tpu.dot_dimension_numbers<[1], [0], [0], [1], [0, 0, 1, 1], [], []>} : vector<16x16xf32>, vector<16x32xf32>, vector<16x32xf32> -> vector<16x32xf32>
    %218 = arith.addf %214, %217 : vector<16x32xf32>
    %219 = arith.addf %142, %218 : vector<16x32xf32>
    %cst_86 = arith.constant dense<0.000000e+00> : vector<16xf32>
    %220 = vector.multi_reduction <add>, %219, %cst_86 [1] : vector<16x32xf32> to vector<16xf32>
    %221 = vector.shape_cast %220 : vector<16xf32> to vector<16x1xf32>
    %cst_87 = arith.constant 3.200000e+01 : f32
    %222 = vector.broadcast %cst_87 : f32 to vector<16x1xf32>
    %223 = arith.divf %221, %222 : vector<16x1xf32>
    %224 = vector.broadcast %223 : vector<16x1xf32> to vector<16x32xf32>
    %225 = arith.subf %219, %224 : vector<16x32xf32>
    %226 = arith.mulf %225, %225 : vector<16x32xf32>
    %cst_88 = arith.constant dense<0.000000e+00> : vector<16xf32>
    %227 = vector.multi_reduction <add>, %226, %cst_88 [1] : vector<16x32xf32> to vector<16xf32>
    %228 = vector.shape_cast %227 : vector<16xf32> to vector<16x1xf32>
    %cst_89 = arith.constant 3.200000e+01 : f32
    %229 = vector.broadcast %cst_89 : f32 to vector<16x1xf32>
    %230 = arith.divf %228, %229 : vector<16x1xf32>
    %231 = vector.broadcast %223 : vector<16x1xf32> to vector<16x32xf32>
    %232 = arith.subf %219, %231 : vector<16x32xf32>
    %cst_90 = arith.constant 9.99999997E-7 : f32
    %233 = vector.broadcast %cst_90 : f32 to vector<16x1xf32>
    %234 = arith.addf %230, %233 : vector<16x1xf32>
    %235 = math.rsqrt %234 : vector<16x1xf32>
    %236 = vector.broadcast %235 : vector<16x1xf32> to vector<16x32xf32>
    %237 = arith.mulf %232, %236 : vector<16x32xf32>
    %238 = vector.broadcast %136 : vector<1x32xf32> to vector<16x32xf32>
    %239 = arith.mulf %237, %238 : vector<16x32xf32>
    %240 = vector.broadcast %137 : vector<1x32xf32> to vector<16x32xf32>
    %241 = arith.addf %239, %240 : vector<16x32xf32>
    %c1_91 = arith.constant 1 : index
    %c0_92 = arith.constant 0 : index
    %c0_93 = arith.constant 0 : index
    %242 = vector.load %arg7[%c1_91, %c0_92, %c0_93] : memref<2x32x64xf32, #tpu.memory_space<vmem>>, vector<1x32x64xf32>
    %243 = vector.shape_cast %242 : vector<1x32x64xf32> to vector<32x64xf32>
    %cst_94 = arith.constant dense<0.000000e+00> : vector<16x64xf32>
    %244 = tpu.matmul %241, %243, %cst_94 {dimension_numbers = #tpu.dot_dimension_numbers<[1], [0], [0], [1], [0, 0, 1, 1], [], []>} : vector<16x32xf32>, vector<32x64xf32>, vector<16x64xf32> -> vector<16x64xf32>
    %245 = vector.broadcast %138 : vector<1x64xf32> to vector<16x64xf32>
    %246 = arith.addf %244, %245 : vector<16x64xf32>
    %cst_95 = arith.constant 0.000000e+00 : f32
    %247 = vector.broadcast %cst_95 : f32 to vector<16x64xf32>
    %248 = arith.maximumf %246, %247 : vector<16x64xf32>
    %c1_96 = arith.constant 1 : index
    %c0_97 = arith.constant 0 : index
    %c0_98 = arith.constant 0 : index
    %249 = vector.load %arg8[%c1_96, %c0_97, %c0_98] : memref<2x64x32xf32, #tpu.memory_space<vmem>>, vector<1x64x32xf32>
    %250 = vector.shape_cast %249 : vector<1x64x32xf32> to vector<64x32xf32>
    %cst_99 = arith.constant dense<0.000000e+00> : vector<16x32xf32>
    %251 = tpu.matmul %248, %250, %cst_99 {dimension_numbers = #tpu.dot_dimension_numbers<[1], [0], [0], [1], [0, 0, 1, 1], [], []>} : vector<16x64xf32>, vector<64x32xf32>, vector<16x32xf32> -> vector<16x32xf32>
    %252 = vector.broadcast %139 : vector<1x32xf32> to vector<16x32xf32>
    %253 = arith.addf %251, %252 : vector<16x32xf32>
    %254 = arith.addf %219, %253 : vector<16x32xf32>
    %c0_100 = arith.constant 0 : index
    %c0_101 = arith.constant 0 : index
    %255 = vector.load %arg10[%c0_100, %c0_101] : memref<16x32xf32, #tpu.memory_space<vmem>>, vector<16x32xf32>
    tpu.vector_store %arg10[%c0_100, %c0_101], %254 {strides = array<i32>} : memref<16x32xf32, #tpu.memory_space<vmem>>, vector<16x32xf32>,
    return
  }
  func.func @transform_0(%arg0: i32) -> (i32, i32) {
    %c0_i32 = arith.constant 0 : i32
    %c0_i32_0 = arith.constant 0 : i32
    %c0_i32_1 = arith.constant 0 : i32
    return %c0_i32, %c0_i32_0 : i32, i32
  }
  func.func @transform_1(%arg0: i32) -> (i32, i32) {
    %c0_i32 = arith.constant 0 : i32
    %c0_i32_0 = arith.constant 0 : i32
    %c0_i32_1 = arith.constant 0 : i32
    return %c0_i32, %c0_i32_0 : i32, i32
  }
  func.func @transform_2(%arg0: i32) -> (i32, i32, i32) {
    %c0_i32 = arith.constant 0 : i32
    %c0_i32_0 = arith.constant 0 : i32
    %c0_i32_1 = arith.constant 0 : i32
    %c0_i32_2 = arith.constant 0 : i32
    return %c0_i32, %c0_i32_0, %c0_i32_1 : i32, i32, i32
  }
  func.func @transform_3(%arg0: i32) -> (i32, i32) {
    %c0_i32 = arith.constant 0 : i32
    %c0_i32_0 = arith.constant 0 : i32
    %c0_i32_1 = arith.constant 0 : i32
    return %c0_i32, %c0_i32_0 : i32, i32
  }
  func.func @transform_4(%arg0: i32) -> (i32, i32, i32) {
    %c0_i32 = arith.constant 0 : i32
    %c0_i32_0 = arith.constant 0 : i32
    %c0_i32_1 = arith.constant 0 : i32
    %c0_i32_2 = arith.constant 0 : i32
    return %c0_i32, %c0_i32_0, %c0_i32_1 : i32, i32, i32
  }
  func.func @transform_5(%arg0: i32) -> (i32, i32, i32) {
    %c0_i32 = arith.constant 0 : i32
    %c0_i32_0 = arith.constant 0 : i32
    %c0_i32_1 = arith.constant 0 : i32
    %c0_i32_2 = arith.constant 0 : i32
    return %c0_i32, %c0_i32_0, %c0_i32_1 : i32, i32, i32
  }
  func.func @transform_6(%arg0: i32) -> (i32, i32, i32) {
    %c0_i32 = arith.constant 0 : i32
    %c0_i32_0 = arith.constant 0 : i32
    %c0_i32_1 = arith.constant 0 : i32
    %c0_i32_2 = arith.constant 0 : i32
    return %c0_i32, %c0_i32_0, %c0_i32_1 : i32, i32, i32
  }
  func.func @transform_7(%arg0: i32) -> (i32, i32, i32) {
    %c0_i32 = arith.constant 0 : i32
    %c0_i32_0 = arith.constant 0 : i32
    %c0_i32_1 = arith.constant 0 : i32
    %c0_i32_2 = arith.constant 0 : i32
    return %c0_i32, %c0_i32_0, %c0_i32_1 : i32, i32, i32
  }
  func.func @transform_8(%arg0: i32) -> (i32, i32, i32) {
    %c0_i32 = arith.constant 0 : i32
    %c0_i32_0 = arith.constant 0 : i32
    %c0_i32_1 = arith.constant 0 : i32
    %c0_i32_2 = arith.constant 0 : i32
    return %c0_i32, %c0_i32_0, %c0_i32_1 : i32, i32, i32
  }
  func.func @transform_9(%arg0: i32) -> (i32, i32) {
    %c0_i32 = arith.constant 0 : i32
    %c0_i32_0 = arith.constant 0 : i32
    %c0_i32_1 = arith.constant 0 : i32
    return %c0_i32, %c0_i32_0 : i32, i32
  }
}

</mosaic_0001>

<llo_original>
// kernel: encoder_forward.1
$region0: #{encoder_forward.1}
  #allocation0 [shape = 'u32[]', space=smem, size = 0x4, offset = 0x4, fixed_abs, tag = 'smem constant byte address 0x4 - core index']
  #allocation1 [shape = 'u32[72,128]{1,0:T(1,128)}', space=vmem, size = 0x9000, scoped, tag = 'internal scratch']
  %s0 = inlined_call_operand.vmem [shape: s32[16,1], index: 0, kind: input, shape index: {}]
  %s1 = inlined_call_operand.vmem [shape: f32[64,32], index: 1, kind: input, shape index: {}]
  %s2 = inlined_call_operand.vmem [shape: f32[2,16,32], index: 2, kind: input, shape index: {}]
  %s3 = inlined_call_operand.vmem [shape: f32[64,16], index: 3, kind: input, shape index: {}]
  %s4 = inlined_call_operand.vmem [shape: f32[2,32,64], index: 4, kind: input, shape index: {}]
  %s5 = inlined_call_operand.vmem [shape: f32[2,32,128], index: 5, kind: input, shape index: {}]
  %s6 = inlined_call_operand.vmem [shape: f32[2,32,64], index: 6, kind: input, shape index: {}]
  %s7 = inlined_call_operand.vmem [shape: f32[2,64,32], index: 7, kind: input, shape index: {}]
  %s8 = inlined_call_operand.vmem [shape: f32[2,6,64], index: 8, kind: input, shape index: {}]
  %s9 = inlined_call_operand.hbm [shape: f32[16,32], index: 9, kind: output, shape index: {}]
  %s10 = sld [smem:[#allocation0]]
  $region46: #{encoder_forward.1} parent=0
    _
  %s12 = ssub.s32 1, %s10
  %s13 = scalar_select 0, %s12, %s10
  $region1: #{encoder_forward.1} parent=0
    #allocation2 [shape = 'u8[8192]{0}', space=vmem, size = 0x2000, scoped, tag = 'output window, operand 0, single buffered']
    #allocation3 [shape = 's32[1]{0}', space=sflag, size = 0x4, scoped, tag = 'scoped memory for encoder_forward.1']
    %14 = vsyncpa [#allocation3], 0
    // Predicated region
    $region2: #{encoder_forward.1} parent=1 // pred_check
      _
    $region3: #{encoder_forward.1} parent=1 // pred_check_branch
      %16 = sbr.rel (0) target = $region5
    $region4: #{encoder_forward.1} parent=1 // pred_region
      _
    $region5: #{encoder_forward.1} parent=1 // pred_fallthru
      _
    // Predicated region
    $region6: #{encoder_forward.1} parent=1 // pred_check
      _
    $region7: #{encoder_forward.1} parent=1 // pred_check_branch
      %18 = sbr.rel (0) target = $region9
    $region8: #{encoder_forward.1} parent=1 // pred_region
      _
    $region9: #{encoder_forward.1} parent=1 // pred_fallthru
      _
    // Predicated region
    $region10: #{encoder_forward.1} parent=1 // pred_check
      _
    $region11: #{encoder_forward.1} parent=1 // pred_check_branch
      %20 = sbr.rel (0) target = $region13
    $region12: #{encoder_forward.1} parent=1 // pred_region
      _
    $region13: #{encoder_forward.1} parent=1 // pred_fallthru
      _
    // Predicated region
    $region14: #{encoder_forward.1} parent=1 // pred_check
      _
    $region15: #{encoder_forward.1} parent=1 // pred_check_branch
      %22 = sbr.rel (0) target = $region17
    $region16: #{encoder_forward.1} parent=1 // pred_region
      _
    $region17: #{encoder_forward.1} parent=1 // pred_fallthru
      _
    // Predicated region
    $region18: #{encoder_forward.1} parent=1 // pred_check
      _
    $region19: #{encoder_forward.1} parent=1 // pred_check_branch
      %24 = sbr.rel (0) target = $region21
    $region20: #{encoder_forward.1} parent=1 // pred_region
      _
    $region21: #{encoder_forward.1} parent=1 // pred_fallthru
      _
    // Predicated region
    $region22: #{encoder_forward.1} parent=1 // pred_check
      _
    $region23: #{encoder_forward.1} parent=1 // pred_check_branch
      %26 = sbr.rel (0) target = $region25
    $region24: #{encoder_forward.1} parent=1 // pred_region
      _
    $region25: #{encoder_forward.1} parent=1 // pred_fallthru
      _
    // Predicated region
    $region26: #{encoder_forward.1} parent=1 // pred_check
      _
    $region27: #{encoder_forward.1} parent=1 // pred_check_branch
      %28 = sbr.rel (0) target = $region29
    $region28: #{encoder_forward.1} parent=1 // pred_region
      _
    $region29: #{encoder_forward.1} parent=1 // pred_fallthru
      _
    // Predicated region
    $region30: #{encoder_forward.1} parent=1 // pred_check
      _
    $region31: #{encoder_forward.1} parent=1 // pred_check_branch
      %30 = sbr.rel (0) target = $region33
    $region32: #{encoder_forward.1} parent=1 // pred_region
      _
    $region33: #{encoder_forward.1} parent=1 // pred_fallthru
      _
    // Predicated region
    $region34: #{encoder_forward.1} parent=1 // pred_check
      _
    $region35: #{encoder_forward.1} parent=1 // pred_check_branch
      %32 = sbr.rel (0) target = $region37
    $region36: #{encoder_forward.1} parent=1 // pred_region
      _
    $region37: #{encoder_forward.1} parent=1 // pred_fallthru
      _
    %v33 = vld [vmem:[%s0] sm:$0xff]
    %v34 = vld [vmem:[%s0 + $0x8] sm:$0xff]
    %v35 = vlaneseq
    %v36 = vand.u32 %v35, 127
    %37 = vset.pattern.permute.xlu0 0
    %38 = vperm.xlu0 %37, %v33
    %v39 = vpop.permute.xlu0 %38
    %40 = vset.pattern.permute.xlu0 0
    %41 = vperm.xlu0 %40, %v34
    %v42 = vpop.permute.xlu0 %41
    %vm43 = vcmp.eq.s32.totalorder %v39, %v36
    %vm44 = vcmp.eq.s32.totalorder %v42, %v36
    %v45 = vsel %vm43, 1, 0
    %v46 = vsel %vm44, 1, 0
    %v47 = vcvt.s32.f32 %v45
    %v48 = vcvt.s32.f32 %v46
    %v49 = vld [vmem:[%s1] sm:$0xff]
    %v50 = vld [vmem:[%s1 + $0x8] sm:$0xff]
    %v51 = vld [vmem:[%s1 + $0x10] sm:$0xff]
    %v52 = vld [vmem:[%s1 + $0x18] sm:$0xff]
    %v53 = vld [vmem:[%s1 + $0x20] sm:$0xff]
    %v54 = vld [vmem:[%s1 + $0x28] sm:$0xff]
    %v55 = vld [vmem:[%s1 + $0x30] sm:$0xff]
    %v56 = vld [vmem:[%s1 + $0x38] sm:$0xff]
    %v57 = vld [vmem:[%s3] sm:$0xff]
    %v58 = vld [vmem:[%s3 + $0x8] sm:$0xff]
    %v59 = vld [vmem:[%s3 + $0x10] sm:$0xff]
    %v60 = vld [vmem:[%s3 + $0x18] sm:$0xff]
    %v61 = vld [vmem:[%s3 + $0x20] sm:$0xff]
    %v62 = vld [vmem:[%s3 + $0x28] sm:$0xff]
    %v63 = vld [vmem:[%s3 + $0x30] sm:$0xff]
    %v64 = vld [vmem:[%s3 + $0x38] sm:$0xff]
    %v65 = vld [vmem:[%s8] sm:$0x3f]
    %v66 = vld [vmem:[%s2] sm:$0xff]
    %v67 = vld [vmem:[%s2 + $0x8] sm:$0xff]
    %vm68 = vcmask 523264
    %v70 = vsel %vm68, %v47, 0
    %v73 = vsel %vm68, %v48, 0
    %75 = vmatpush.msra.mxu0 0.0
    %76 = vmatpush.msra.mxu0 0.0
    %77 = vmatpush.msra.mxu0 0.0
    %78 = vmatpush.msra.mxu0 0.0
    %79 = vmatpush.msra.mxu0 0.0
    %80 = vmatpush.msra.mxu0 0.0
    %81 = vmatpush.msra.mxu0 0.0
    %82 = vmatpush.msra.mxu0 0.0
    %83 = vmatpush.msra.mxu0 %v56
    %84 = vmatpush.msra.mxu0 %v55
    %85 = vmatpush.msra.mxu0 %v54
    %86 = vmatpush.msra.mxu0 %v53
    %87 = vmatpush.msra.mxu0 %v52
    %88 = vmatpush.msra.mxu0 %v51
    %89 = vmatpush.msra.mxu0 %v50
    %90 = vmatpush.msra.mxu0 %v49
    %91 = vmatmul.f32.gmra.mxu0 %v70
    %v92 = vpop.f32.mrf.mxu0
    %v93 = vadd.f32 %v66, %v92
    %94 = vmatmul.f32.gmra.mxu0 %v73
    %v95 = vpop.f32.mrf.mxu0
    %v96 = vadd.f32 %v67, %v95
    %97 = vdwg.mxu0
    %vm98 = vcmask 261120
    %v99 = vsel %vm98, %v93, 0.0
    %100 = vadd.xlane.f32.xlu0 %v99
    %v101 = vpop.xlane.xlu0 %100
    %v102 = vsel %vm98, %v96, 0.0
    %103 = vadd.xlane.f32.xlu0 %v102
    %v104 = vpop.xlane.xlu0 %103
    %v105 = vrcp.pop 32.0
    %v106 = vmul.f32 32.0, %v105
    %v107 = vsub.f32 1.0, %v106
    %v108 = vmul.f32 %v105, %v107
    %v109 = vadd.f32 %v105, %v108
    %vm110 = vweird.f32 %v105
    %v111 = vsel %vm110, %v105, %v109
    %v112 = vmul.f32 %v101, %v111
    %v113 = vmul.f32 %v104, %v111
    %v114 = vsub.f32 %v93, %v112
    %v115 = vsub.f32 %v96, %v113
    %v116 = vmul.f32 %v114, %v114
    %v117 = vmul.f32 %v115, %v115
    %v118 = vsel %vm98, %v116, 0.0
    %119 = vadd.xlane.f32.xlu0 %v118
    %v120 = vpop.xlane.xlu0 %119
    %v121 = vsel %vm98, %v117, 0.0
    %122 = vadd.xlane.f32.xlu0 %v121
    %v123 = vpop.xlane.xlu0 %122
    %v124 = vmul.f32 %v120, %v111
    %v125 = vmul.f32 %v123, %v111
    %v126 = vadd.f32 %v124, 1e-06
    %v127 = vadd.f32 %v125, 1e-06
    %v128 = vrsqrt.pop %v126
    %v129 = vmul.f32 %v128, %v126
    %v130 = vmul.f32 %v129, %v128
    %v131 = vmul.f32 0.5, %v130
    %v132 = vsub.f32 1.5, %v131
    %v133 = vmul.f32 %v128, %v132
    %vm134 = vweird.f32 %v126
    %vm135 = vweird.f32 %v128
    %vm136 = vmor %vm134, %vm135
    %v137 = vsel %vm136, %v128, %v133
    %v138 = vrsqrt.pop %v127
    %v139 = vmul.f32 %v138, %v127
    %v140 = vmul.f32 %v139, %v138
    %v141 = vmul.f32 0.5, %v140
    %v142 = vsub.f32 1.5, %v141
    %v143 = vmul.f32 %v138, %v142
    %vm144 = vweird.f32 %v127
    %vm145 = vweird.f32 %v138
    %vm146 = vmor %vm144, %vm145
    %v147 = vsel %vm146, %v138, %v143
    %v148 = vmul.f32 %v114, %v137
    %v149 = vmul.f32 %v115, %v147
    %v150 = vperm.slane %v65, 0
    %v151 = vmul.f32 %v148, %v150
    %v152 = vmul.f32 %v149, %v150
    %v153 = vperm.slane %v65, 1
    %v154 = vadd.f32 %v151, %v153
    %v155 = vadd.f32 %v152, %v153
    %v156 = vld [vmem:[%s4] sm:$0xff]
    %v157 = vld [vmem:[%s4 + $0x8] sm:$0xff]
    %v158 = vld [vmem:[%s4 + $0x10] sm:$0xff]
    %v159 = vld [vmem:[%s4 + $0x18] sm:$0xff]
    %v161 = vsel %vm98, %v154, 0
    %v164 = vsel %vm98, %v155, 0
    %166 = vmatpush.msra.mxu0 0.0
    %167 = vmatpush.msra.mxu0 0.0
    %168 = vmatpush.msra.mxu0 0.0
    %169 = vmatpush.msra.mxu0 0.0
    %170 = vmatpush.msra.mxu0 0.0
    %171 = vmatpush.msra.mxu0 0.0
    %172 = vmatpush.msra.mxu0 0.0
    %173 = vmatpush.msra.mxu0 0.0
    %174 = vmatpush.msra.mxu0 0.0
    %175 = vmatpush.msra.mxu0 0.0
    %176 = vmatpush.msra.mxu0 0.0
    %177 = vmatpush.msra.mxu0 0.0
    %178 = vmatpush.msra.mxu0 %v159
    %179 = vmatpush.msra.mxu0 %v158
    %180 = vmatpush.msra.mxu0 %v157
    %181 = vmatpush.msra.mxu0 %v156
    %182 = vmatmul.f32.gmra.mxu0 %v161
    %v183 = vpop.f32.mrf.mxu0
    %v184 = vadd.f32 0.0, %v183
    %185 = vmatmul.f32.gmra.mxu0 %v164
    %v186 = vpop.f32.mrf.mxu0
    %v187 = vadd.f32 0.0, %v186
    %188 = vdwg.mxu0
    %v189 = vld [vmem:[%s5] sm:$0xff]
    %v190 = vld [vmem:[%s5 + $0x8] sm:$0xff]
    %v191 = vld [vmem:[%s5 + $0x10] sm:$0xff]
    %v192 = vld [vmem:[%s5 + $0x18] sm:$0xff]
    %193 = vmatpush.msra.mxu0 0.0
    %194 = vmatpush.msra.mxu0 0.0
    %195 = vmatpush.msra.mxu0 0.0
    %196 = vmatpush.msra.mxu0 0.0
    %197 = vmatpush.msra.mxu0 0.0
    %198 = vmatpush.msra.mxu0 0.0
    %199 = vmatpush.msra.mxu0 0.0
    %200 = vmatpush.msra.mxu0 0.0
    %201 = vmatpush.msra.mxu0 0.0
    %202 = vmatpush.msra.mxu0 0.0
    %203 = vmatpush.msra.mxu0 0.0
    %204 = vmatpush.msra.mxu0 0.0
    %205 = vmatpush.msra.mxu0 %v192
    %206 = vmatpush.msra.mxu0 %v191
    %207 = vmatpush.msra.mxu0 %v190
    %208 = vmatpush.msra.mxu0 %v189
    %209 = vmatmul.f32.gmra.mxu0 %v161
    %v210 = vpop.f32.mrf.mxu0
    %v211 = vadd.f32 0.0, %v210
    %212 = vmatmul.f32.gmra.mxu0 %v164
    %v213 = vpop.f32.mrf.mxu0
    %v214 = vadd.f32 0.0, %v213
    %215 = vdwg.mxu0
    %218 = vrot.lane.b32.xlu0 %v184, 96
    %v219 = vpop.permute.xlu0 %218
    %220 = vrot.lane.b32.xlu0 %v187, 96
    %v221 = vpop.permute.xlu0 %220
    %vm222 = vcmask 64512
    %v223 = vsel %vm222, %v184, 0
    %v225 = vsel %vm222, %v187, 0
    %v227 = vsel %vm222, %v219, 0
    %v229 = vsel %vm222, %v221, 0
    %231 = vmatpush.xpose.msra.mxu0 0.0
    %232 = vmatpush.xpose.msra.mxu0 0.0
    %233 = vmatpush.xpose.msra.mxu0 0.0
    %234 = vmatpush.xpose.msra.mxu0 0.0
    %235 = vmatpush.xpose.msra.mxu0 0.0
    %236 = vmatpush.xpose.msra.mxu0 0.0
    %237 = vmatpush.xpose.msra.mxu0 0.0
    %238 = vmatpush.xpose.msra.mxu0 0.0
    %239 = vmatpush.xpose.msra.mxu0 0.0
    %240 = vmatpush.xpose.msra.mxu0 0.0
    %241 = vmatpush.xpose.msra.mxu0 0.0
    %242 = vmatpush.xpose.msra.mxu0 0.0
    %243 = vmatpush.xpose.msra.mxu0 0.0
    %244 = vmatpush.xpose.msra.mxu0 0.0
    %245 = vmatpush.xpose.msra.mxu0 %v229
    %246 = vmatpush.xpose.msra.mxu0 %v227
    %247 = vmatmul.f32.gmra.mxu0 %v223
    %v248 = vpop.f32.mrf.mxu0
    %v249 = vadd.f32 0.0, %v248
    %250 = vmatmul.f32.gmra.mxu0 %v225
    %v251 = vpop.f32.mrf.mxu0
    %v252 = vadd.f32 0.0, %v251
    %253 = vdwg.mxu0
    %v254 = vmul.f32 %v249, 0.35355338
    %v255 = vmul.f32 %v252, 0.35355338
    %256 = vrot.lane.b32.xlu0 %v184, 120
    %v257 = vpop.permute.xlu0 %256
    %258 = vrot.lane.b32.xlu0 %v187, 120
    %v259 = vpop.permute.xlu0 %258
    %260 = vrot.lane.b32.xlu0 %v184, 88
    %v261 = vpop.permute.xlu0 %260
    %262 = vrot.lane.b32.xlu0 %v187, 88
    %v263 = vpop.permute.xlu0 %262
    %v264 = vsel %vm222, %v257, 0
    %v266 = vsel %vm222, %v259, 0
    %v268 = vsel %vm222, %v261, 0
    %v270 = vsel %vm222, %v263, 0
    %272 = vmatpush.xpose.msra.mxu0 0.0
    %273 = vmatpush.xpose.msra.mxu0 0.0
    %274 = vmatpush.xpose.msra.mxu0 0.0
    %275 = vmatpush.xpose.msra.mxu0 0.0
    %276 = vmatpush.xpose.msra.mxu0 0.0
    %277 = vmatpush.xpose.msra.mxu0 0.0
    %278 = vmatpush.xpose.msra.mxu0 0.0
    %279 = vmatpush.xpose.msra.mxu0 0.0
    %280 = vmatpush.xpose.msra.mxu0 0.0
    %281 = vmatpush.xpose.msra.mxu0 0.0
    %282 = vmatpush.xpose.msra.mxu0 0.0
    %283 = vmatpush.xpose.msra.mxu0 0.0
    %284 = vmatpush.xpose.msra.mxu0 0.0
    %285 = vmatpush.xpose.msra.mxu0 0.0
    %286 = vmatpush.xpose.msra.mxu0 %v270
    %287 = vmatpush.xpose.msra.mxu0 %v268
    %288 = vmatmul.f32.gmra.mxu0 %v264
    %v289 = vpop.f32.mrf.mxu0
    %v290 = vadd.f32 0.0, %v289
    %291 = vmatmul.f32.gmra.mxu0 %v266
    %v292 = vpop.f32.mrf.mxu0
    %v293 = vadd.f32 0.0, %v292
    %294 = vdwg.mxu0
    %v295 = vmul.f32 %v290, 0.35355338
    %v296 = vmul.f32 %v293, 0.35355338
    %297 = vrot.lane.b32.xlu0 %v184, 112
    %v298 = vpop.permute.xlu0 %297
    %299 = vrot.lane.b32.xlu0 %v187, 112
    %v300 = vpop.permute.xlu0 %299
    %301 = vrot.lane.b32.xlu0 %v184, 80
    %v302 = vpop.permute.xlu0 %301
    %303 = vrot.lane.b32.xlu0 %v187, 80
    %v304 = vpop.permute.xlu0 %303
    %v305 = vsel %vm222, %v298, 0
    %v307 = vsel %vm222, %v300, 0
    %v309 = vsel %vm222, %v302, 0
    %v311 = vsel %vm222, %v304, 0
    %313 = vmatpush.xpose.msra.mxu0 0.0
    %314 = vmatpush.xpose.msra.mxu0 0.0
    %315 = vmatpush.xpose.msra.mxu0 0.0
    %316 = vmatpush.xpose.msra.mxu0 0.0
    %317 = vmatpush.xpose.msra.mxu0 0.0
    %318 = vmatpush.xpose.msra.mxu0 0.0
    %319 = vmatpush.xpose.msra.mxu0 0.0
    %320 = vmatpush.xpose.msra.mxu0 0.0
    %321 = vmatpush.xpose.msra.mxu0 0.0
    %322 = vmatpush.xpose.msra.mxu0 0.0
    %323 = vmatpush.xpose.msra.mxu0 0.0
    %324 = vmatpush.xpose.msra.mxu0 0.0
    %325 = vmatpush.xpose.msra.mxu0 0.0
    %326 = vmatpush.xpose.msra.mxu0 0.0
    %327 = vmatpush.xpose.msra.mxu0 %v311
    %328 = vmatpush.xpose.msra.mxu0 %v309
    %329 = vmatmul.f32.gmra.mxu0 %v305
    %v330 = vpop.f32.mrf.mxu0
    %v331 = vadd.f32 0.0, %v330
    %332 = vmatmul.f32.gmra.mxu0 %v307
    %v333 = vpop.f32.mrf.mxu0
    %v334 = vadd.f32 0.0, %v333
    %335 = vdwg.mxu0
    %v336 = vmul.f32 %v331, 0.35355338
    %v337 = vmul.f32 %v334, 0.35355338
    %338 = vrot.lane.b32.xlu0 %v184, 104
    %v339 = vpop.permute.xlu0 %338
    %340 = vrot.lane.b32.xlu0 %v187, 104
    %v341 = vpop.permute.xlu0 %340
    %342 = vrot.lane.b32.xlu0 %v184, 72
    %v343 = vpop.permute.xlu0 %342
    %344 = vrot.lane.b32.xlu0 %v187, 72
    %v345 = vpop.permute.xlu0 %344
    %v346 = vsel %vm222, %v339, 0
    %v348 = vsel %vm222, %v341, 0
    %v350 = vsel %vm222, %v343, 0
    %v352 = vsel %vm222, %v345, 0
    %354 = vmatpush.xpose.msra.mxu0 0.0
    %355 = vmatpush.xpose.msra.mxu0 0.0
    %356 = vmatpush.xpose.msra.mxu0 0.0
    %357 = vmatpush.xpose.msra.mxu0 0.0
    %358 = vmatpush.xpose.msra.mxu0 0.0
    %359 = vmatpush.xpose.msra.mxu0 0.0
    %360 = vmatpush.xpose.msra.mxu0 0.0
    %361 = vmatpush.xpose.msra.mxu0 0.0
    %362 = vmatpush.xpose.msra.mxu0 0.0
    %363 = vmatpush.xpose.msra.mxu0 0.0
    %364 = vmatpush.xpose.msra.mxu0 0.0
    %365 = vmatpush.xpose.msra.mxu0 0.0
    %366 = vmatpush.xpose.msra.mxu0 0.0
    %367 = vmatpush.xpose.msra.mxu0 0.0
    %368 = vmatpush.xpose.msra.mxu0 %v352
    %369 = vmatpush.xpose.msra.mxu0 %v350
    %370 = vmatmul.f32.gmra.mxu0 %v346
    %v371 = vpop.f32.mrf.mxu0
    %v372 = vadd.f32 0.0, %v371
    %373 = vmatmul.f32.gmra.mxu0 %v348
    %v374 = vpop.f32.mrf.mxu0
    %v375 = vadd.f32 0.0, %v374
    %376 = vdwg.mxu0
    %v377 = vmul.f32 %v372, 0.35355338
    %v378 = vmul.f32 %v375, 0.35355338
    %v379 = vadd.f32 %v254, %v57
    %v380 = vadd.f32 %v255, %v58
    %v381 = vadd.f32 %v295, %v59
    %v382 = vadd.f32 %v296, %v60
    %v383 = vadd.f32 %v336, %v61
    %v384 = vadd.f32 %v337, %v62
    %v385 = vadd.f32 %v377, %v63
    %v386 = vadd.f32 %v378, %v64
    %vm387 = vcmask 130048
    %v388 = vsel %vm387, %v379, -inf
    %389 = vmax.xlane.f32.xlu0 %v388
    %v390 = vpop.xlane.xlu0 %389
    %v391 = vsel %vm387, %v380, -inf
    %392 = vmax.xlane.f32.xlu0 %v391
    %v393 = vpop.xlane.xlu0 %392
    %v394 = vsel %vm387, %v381, -inf
    %395 = vmax.xlane.f32.xlu0 %v394
    %v396 = vpop.xlane.xlu0 %395
    %v397 = vsel %vm387, %v382, -inf
    %398 = vmax.xlane.f32.xlu0 %v397
    %v399 = vpop.xlane.xlu0 %398
    %v400 = vsel %vm387, %v383, -inf
    %401 = vmax.xlane.f32.xlu0 %v400
    %v402 = vpop.xlane.xlu0 %401
    %v403 = vsel %vm387, %v384, -inf
    %404 = vmax.xlane.f32.xlu0 %v403
    %v405 = vpop.xlane.xlu0 %404
    %v406 = vsel %vm387, %v385, -inf
    %407 = vmax.xlane.f32.xlu0 %v406
    %v408 = vpop.xlane.xlu0 %407
    %v409 = vsel %vm387, %v386, -inf
    %410 = vmax.xlane.f32.xlu0 %v409
    %v411 = vpop.xlane.xlu0 %410
    %v412 = vsub.f32 %v379, %v390
    %v413 = vsub.f32 %v380, %v393
    %v414 = vsub.f32 %v381, %v396
    %v415 = vsub.f32 %v382, %v399
    %v416 = vsub.f32 %v383, %v402
    %v417 = vsub.f32 %v384, %v405
    %v418 = vsub.f32 %v385, %v408
    %v419 = vsub.f32 %v386, %v411
    %v420 = vmul.f32 %v412, 1.442695
    %v421 = vpow.pop %v420
    %v422 = vmul.f32 %v413, 1.442695
    %v423 = vpow.pop %v422
    %v424 = vmul.f32 %v414, 1.442695
    %v425 = vpow.pop %v424
    %v426 = vmul.f32 %v415, 1.442695
    %v427 = vpow.pop %v426
    %v428 = vmul.f32 %v416, 1.442695
    %v429 = vpow.pop %v428
    %v430 = vmul.f32 %v417, 1.442695
    %v431 = vpow.pop %v430
    %v432 = vmul.f32 %v418, 1.442695
    %v433 = vpow.pop %v432
    %v434 = vmul.f32 %v419, 1.442695
    %v435 = vpow.pop %v434
    %v436 = vsel %vm387, %v421, 0.0
    %437 = vadd.xlane.f32.xlu0 %v436
    %v438 = vpop.xlane.xlu0 %437
    %v439 = vsel %vm387, %v423, 0.0
    %440 = vadd.xlane.f32.xlu0 %v439
    %v441 = vpop.xlane.xlu0 %440
    %v442 = vsel %vm387, %v425, 0.0
    %443 = vadd.xlane.f32.xlu0 %v442
    %v444 = vpop.xlane.xlu0 %443
    %v445 = vsel %vm387, %v427, 0.0
    %446 = vadd.xlane.f32.xlu0 %v445
    %v447 = vpop.xlane.xlu0 %446
    %v448 = vsel %vm387, %v429, 0.0
    %449 = vadd.xlane.f32.xlu0 %v448
    %v450 = vpop.xlane.xlu0 %449
    %v451 = vsel %vm387, %v431, 0.0
    %452 = vadd.xlane.f32.xlu0 %v451
    %v453 = vpop.xlane.xlu0 %452
    %v454 = vsel %vm387, %v433, 0.0
    %455 = vadd.xlane.f32.xlu0 %v454
    %v456 = vpop.xlane.xlu0 %455
    %v457 = vsel %vm387, %v435, 0.0
    %458 = vadd.xlane.f32.xlu0 %v457
    %v459 = vpop.xlane.xlu0 %458
    %v460 = vrcp.pop %v438
    %v461 = vmul.f32 %v438, %v460
    %v462 = vsub.f32 1.0, %v461
    %v463 = vmul.f32 %v460, %v462
    %v464 = vadd.f32 %v460, %v463
    %vm465 = vweird.f32 %v438
    %vm466 = vweird.f32 %v460
    %vm467 = vmor %vm465, %vm466
    %v468 = vsel %vm467, %v460, %v464
    %v469 = vand.u32 2147483647, %v438
    %vm470 = vcmp.eq.f32.partialorder %v469, 8.507059e+37
    %v471 = vand.u32 %v438, 2147483648
    %v472 = vor.u32 1.1754944e-38, %v471
    %v473 = vsel %vm470, %v472, %v468
    %v474 = vmul.f32 %v421, %v473
    %v475 = vrcp.pop %v441
    %v476 = vmul.f32 %v441, %v475
    %v477 = vsub.f32 1.0, %v476
    %v478 = vmul.f32 %v475, %v477
    %v479 = vadd.f32 %v475, %v478
    %vm480 = vweird.f32 %v441
    %vm481 = vweird.f32 %v475
    %vm482 = vmor %vm480, %vm481
    %v483 = vsel %vm482, %v475, %v479
    %v484 = vand.u32 2147483647, %v441
    %vm485 = vcmp.eq.f32.partialorder %v484, 8.507059e+37
    %v486 = vand.u32 %v441, 2147483648
    %v487 = vor.u32 1.1754944e-38, %v486
    %v488 = vsel %vm485, %v487, %v483
    %v489 = vmul.f32 %v423, %v488
    %v490 = vrcp.pop %v444
    %v491 = vmul.f32 %v444, %v490
    %v492 = vsub.f32 1.0, %v491
    %v493 = vmul.f32 %v490, %v492
    %v494 = vadd.f32 %v490, %v493
    %vm495 = vweird.f32 %v444
    %vm496 = vweird.f32 %v490
    %vm497 = vmor %vm495, %vm496
    %v498 = vsel %vm497, %v490, %v494
    %v499 = vand.u32 2147483647, %v444
    %vm500 = vcmp.eq.f32.partialorder %v499, 8.507059e+37
    %v501 = vand.u32 %v444, 2147483648
    %v502 = vor.u32 1.1754944e-38, %v501
    %v503 = vsel %vm500, %v502, %v498
    %v504 = vmul.f32 %v425, %v503
    %v505 = vrcp.pop %v447
    %v506 = vmul.f32 %v447, %v505
    %v507 = vsub.f32 1.0, %v506
    %v508 = vmul.f32 %v505, %v507
    %v509 = vadd.f32 %v505, %v508
    %vm510 = vweird.f32 %v447
    %vm511 = vweird.f32 %v505
    %vm512 = vmor %vm510, %vm511
    %v513 = vsel %vm512, %v505, %v509
    %v514 = vand.u32 2147483647, %v447
    %vm515 = vcmp.eq.f32.partialorder %v514, 8.507059e+37
    %v516 = vand.u32 %v447, 2147483648
    %v517 = vor.u32 1.1754944e-38, %v516
    %v518 = vsel %vm515, %v517, %v513
    %v519 = vmul.f32 %v427, %v518
    %v520 = vrcp.pop %v450
    %v521 = vmul.f32 %v450, %v520
    %v522 = vsub.f32 1.0, %v521
    %v523 = vmul.f32 %v520, %v522
    %v524 = vadd.f32 %v520, %v523
    %vm525 = vweird.f32 %v450
    %vm526 = vweird.f32 %v520
    %vm527 = vmor %vm525, %vm526
    %v528 = vsel %vm527, %v520, %v524
    %v529 = vand.u32 2147483647, %v450
    %vm530 = vcmp.eq.f32.partialorder %v529, 8.507059e+37
    %v531 = vand.u32 %v450, 2147483648
    %v532 = vor.u32 1.1754944e-38, %v531
    %v533 = vsel %vm530, %v532, %v528
    %v534 = vmul.f32 %v429, %v533
    %v535 = vrcp.pop %v453
    %v536 = vmul.f32 %v453, %v535
    %v537 = vsub.f32 1.0, %v536
    %v538 = vmul.f32 %v535, %v537
    %v539 = vadd.f32 %v535, %v538
    %vm540 = vweird.f32 %v453
    %vm541 = vweird.f32 %v535
    %vm542 = vmor %vm540, %vm541
    %v543 = vsel %vm542, %v535, %v539
    %v544 = vand.u32 2147483647, %v453
    %vm545 = vcmp.eq.f32.partialorder %v544, 8.507059e+37
    %v546 = vand.u32 %v453, 2147483648
    %v547 = vor.u32 1.1754944e-38, %v546
    %v548 = vsel %vm545, %v547, %v543
    %v549 = vmul.f32 %v431, %v548
    %v550 = vrcp.pop %v456
    %v551 = vmul.f32 %v456, %v550
    %v552 = vsub.f32 1.0, %v551
    %v553 = vmul.f32 %v550, %v552
    %v554 = vadd.f32 %v550, %v553
    %vm555 = vweird.f32 %v456
    %vm556 = vweird.f32 %v550
    %vm557 = vmor %vm555, %vm556
    %v558 = vsel %vm557, %v550, %v554
    %v559 = vand.u32 2147483647, %v456
    %vm560 = vcmp.eq.f32.partialorder %v559, 8.507059e+37
    %v561 = vand.u32 %v456, 2147483648
    %v562 = vor.u32 1.1754944e-38, %v561
    %v563 = vsel %vm560, %v562, %v558
    %v564 = vmul.f32 %v433, %v563
    %v565 = vrcp.pop %v459
    %v566 = vmul.f32 %v459, %v565
    %v567 = vsub.f32 1.0, %v566
    %v568 = vmul.f32 %v565, %v567
    %v569 = vadd.f32 %v565, %v568
    %vm570 = vweird.f32 %v459
    %vm571 = vweird.f32 %v565
    %vm572 = vmor %vm570, %vm571
    %v573 = vsel %vm572, %v565, %v569
    %v574 = vand.u32 2147483647, %v459
    %vm575 = vcmp.eq.f32.partialorder %v574, 8.507059e+37
    %v576 = vand.u32 %v459, 2147483648
    %v577 = vor.u32 1.1754944e-38, %v576
    %v578 = vsel %vm575, %v577, %v573
    %v579 = vmul.f32 %v435, %v578
    %582 = vrot.lane.b32.xlu0 %v211, 96
    %v583 = vpop.permute.xlu0 %582
    %584 = vrot.lane.b32.xlu0 %v214, 96
    %v585 = vpop.permute.xlu0 %584
    %v589 = vsel %vm387, %v504, 0
    %v592 = vsel %vm387, %v519, 0
    %594 = vmatpush.msra.mxu0 0.0
    %595 = vmatpush.msra.mxu0 0.0
    %596 = vmatpush.msra.mxu0 0.0
    %597 = vmatpush.msra.mxu0 0.0
    %598 = vmatpush.msra.mxu0 0.0
    %599 = vmatpush.msra.mxu0 0.0
    %600 = vmatpush.msra.mxu0 0.0
    %601 = vmatpush.msra.mxu0 0.0
    %602 = vmatpush.msra.mxu0 0.0
    %603 = vmatpush.msra.mxu0 0.0
    %604 = vmatpush.msra.mxu0 0.0
    %605 = vmatpush.msra.mxu0 0.0
    %606 = vmatpush.msra.mxu0 0.0
    %607 = vmatpush.msra.mxu0 0.0
    %608 = vmatpush.msra.mxu0 %v585
    %609 = vmatpush.msra.mxu0 %v583
    %610 = vmatmul.f32.gmra.mxu0 %v589
    %v611 = vpop.f32.mrf.mxu0
    %v612 = vadd.f32 0.0, %v611
    %613 = vmatmul.f32.gmra.mxu0 %v592
    %v614 = vpop.f32.mrf.mxu0
    %v615 = vadd.f32 0.0, %v614
    %616 = vdwg.mxu0
    %v618 = vsel %vm387, %v474, 0
    %v621 = vsel %vm387, %v489, 0
    %623 = vmatpush.msra.mxu0 0.0
    %624 = vmatpush.msra.mxu0 0.0
    %625 = vmatpush.msra.mxu0 0.0
    %626 = vmatpush.msra.mxu0 0.0
    %627 = vmatpush.msra.mxu0 0.0
    %628 = vmatpush.msra.mxu0 0.0
    %629 = vmatpush.msra.mxu0 0.0
    %630 = vmatpush.msra.mxu0 0.0
    %631 = vmatpush.msra.mxu0 0.0
    %632 = vmatpush.msra.mxu0 0.0
    %633 = vmatpush.msra.mxu0 0.0
    %634 = vmatpush.msra.mxu0 0.0
    %635 = vmatpush.msra.mxu0 0.0
    %636 = vmatpush.msra.mxu0 0.0
    %637 = vmatpush.msra.mxu0 %v214
    %638 = vmatpush.msra.mxu0 %v211
    %639 = vmatmul.f32.gmra.mxu0 %v618
    %v640 = vpop.f32.mrf.mxu0
    %v641 = vadd.f32 %v612, %v640
    %642 = vmatmul.f32.gmra.mxu0 %v621
    %v643 = vpop.f32.mrf.mxu0
    %v644 = vadd.f32 %v615, %v643
    %645 = vdwg.mxu0
    %646 = vrot.lane.b32.xlu0 %v211, 64
    %v647 = vpop.permute.xlu0 %646
    %648 = vrot.lane.b32.xlu0 %v214, 64
    %v649 = vpop.permute.xlu0 %648
    %v653 = vsel %vm387, %v534, 0
    %v656 = vsel %vm387, %v549, 0
    %658 = vmatpush.msra.mxu0 0.0
    %659 = vmatpush.msra.mxu0 0.0
    %660 = vmatpush.msra.mxu0 0.0
    %661 = vmatpush.msra.mxu0 0.0
    %662 = vmatpush.msra.mxu0 0.0
    %663 = vmatpush.msra.mxu0 0.0
    %664 = vmatpush.msra.mxu0 0.0
    %665 = vmatpush.msra.mxu0 0.0
    %666 = vmatpush.msra.mxu0 0.0
    %667 = vmatpush.msra.mxu0 0.0
    %668 = vmatpush.msra.mxu0 0.0
    %669 = vmatpush.msra.mxu0 0.0
    %670 = vmatpush.msra.mxu0 0.0
    %671 = vmatpush.msra.mxu0 0.0
    %672 = vmatpush.msra.mxu0 %v649
    %673 = vmatpush.msra.mxu0 %v647
    %674 = vmatmul.f32.gmra.mxu0 %v653
    %v675 = vpop.f32.mrf.mxu0
    %v676 = vadd.f32 0.0, %v675
    %677 = vmatmul.f32.gmra.mxu0 %v656
    %v678 = vpop.f32.mrf.mxu0
    %v679 = vadd.f32 0.0, %v678
    %680 = vdwg.mxu0
    %v681 = vadd.f32 %v641, %v676
    %v682 = vadd.f32 %v644, %v679
    %683 = vrot.lane.b32.xlu0 %v211, 32
    %v684 = vpop.permute.xlu0 %683
    %685 = vrot.lane.b32.xlu0 %v214, 32
    %v686 = vpop.permute.xlu0 %685
    %v690 = vsel %vm387, %v564, 0
    %v693 = vsel %vm387, %v579, 0
    %695 = vmatpush.msra.mxu0 0.0
    %696 = vmatpush.msra.mxu0 0.0
    %697 = vmatpush.msra.mxu0 0.0
    %698 = vmatpush.msra.mxu0 0.0
    %699 = vmatpush.msra.mxu0 0.0
    %700 = vmatpush.msra.mxu0 0.0
    %701 = vmatpush.msra.mxu0 0.0
    %702 = vmatpush.msra.mxu0 0.0
    %703 = vmatpush.msra.mxu0 0.0
    %704 = vmatpush.msra.mxu0 0.0
    %705 = vmatpush.msra.mxu0 0.0
    %706 = vmatpush.msra.mxu0 0.0
    %707 = vmatpush.msra.mxu0 0.0
    %708 = vmatpush.msra.mxu0 0.0
    %709 = vmatpush.msra.mxu0 %v686
    %710 = vmatpush.msra.mxu0 %v684
    %711 = vmatmul.f32.gmra.mxu0 %v690
    %v712 = vpop.f32.mrf.mxu0
    %v713 = vadd.f32 0.0, %v712
    %714 = vmatmul.f32.gmra.mxu0 %v693
    %v715 = vpop.f32.mrf.mxu0
    %v716 = vadd.f32 0.0, %v715
    %717 = vdwg.mxu0
    %v718 = vadd.f32 %v681, %v713
    %v719 = vadd.f32 %v682, %v716
    %v720 = vadd.f32 %v93, %v718
    %v721 = vadd.f32 %v96, %v719
    %v722 = vsel %vm98, %v720, 0.0
    %723 = vadd.xlane.f32.xlu0 %v722
    %v724 = vpop.xlane.xlu0 %723
    %v725 = vsel %vm98, %v721, 0.0
    %726 = vadd.xlane.f32.xlu0 %v725
    %v727 = vpop.xlane.xlu0 %726
    %v728 = vmul.f32 %v724, %v111
    %v729 = vmul.f32 %v727, %v111
    %v730 = vsub.f32 %v720, %v728
    %v731 = vsub.f32 %v721, %v729
    %v732 = vmul.f32 %v730, %v730
    %v733 = vmul.f32 %v731, %v731
    %v734 = vsel %vm98, %v732, 0.0
    %735 = vadd.xlane.f32.xlu0 %v734
    %v736 = vpop.xlane.xlu0 %735
    %v737 = vsel %vm98, %v733, 0.0
    %738 = vadd.xlane.f32.xlu0 %v737
    %v739 = vpop.xlane.xlu0 %738
    %v740 = vmul.f32 %v736, %v111
    %v741 = vmul.f32 %v739, %v111
    %v742 = vadd.f32 %v740, 1e-06
    %v743 = vadd.f32 %v741, 1e-06
    %v744 = vrsqrt.pop %v742
    %v745 = vmul.f32 %v744, %v742
    %v746 = vmul.f32 %v745, %v744
    %v747 = vmul.f32 0.5, %v746
    %v748 = vsub.f32 1.5, %v747
    %v749 = vmul.f32 %v744, %v748
    %vm750 = vweird.f32 %v742
    %vm751 = vweird.f32 %v744
    %vm752 = vmor %vm750, %vm751
    %v753 = vsel %vm752, %v744, %v749
    %v754 = vrsqrt.pop %v743
    %v755 = vmul.f32 %v754, %v743
    %v756 = vmul.f32 %v755, %v754
    %v757 = vmul.f32 0.5, %v756
    %v758 = vsub.f32 1.5, %v757
    %v759 = vmul.f32 %v754, %v758
    %vm760 = vweird.f32 %v743
    %vm761 = vweird.f32 %v754
    %vm762 = vmor %vm760, %vm761
    %v763 = vsel %vm762, %v754, %v759
    %v764 = vmul.f32 %v730, %v753
    %v765 = vmul.f32 %v731, %v763
    %v766 = vperm.slane %v65, 2
    %v767 = vmul.f32 %v764, %v766
    %v768 = vmul.f32 %v765, %v766
    %v769 = vperm.slane %v65, 3
    %v770 = vadd.f32 %v767, %v769
    %v771 = vadd.f32 %v768, %v769
    %v772 = vld [vmem:[%s6] sm:$0xff]
    %v773 = vld [vmem:[%s6 + $0x8] sm:$0xff]
    %v774 = vld [vmem:[%s6 + $0x10] sm:$0xff]
    %v775 = vld [vmem:[%s6 + $0x18] sm:$0xff]
    %v776 = vperm.slane %v65, 4
    %v778 = vsel %vm98, %v770, 0
    %v781 = vsel %vm98, %v771, 0
    %783 = vmatpush.msra.mxu0 0.0
    %784 = vmatpush.msra.mxu0 0.0
    %785 = vmatpush.msra.mxu0 0.0
    %786 = vmatpush.msra.mxu0 0.0
    %787 = vmatpush.msra.mxu0 0.0
    %788 = vmatpush.msra.mxu0 0.0
    %789 = vmatpush.msra.mxu0 0.0
    %790 = vmatpush.msra.mxu0 0.0
    %791 = vmatpush.msra.mxu0 0.0
    %792 = vmatpush.msra.mxu0 0.0
    %793 = vmatpush.msra.mxu0 0.0
    %794 = vmatpush.msra.mxu0 0.0
    %795 = vmatpush.msra.mxu0 %v775
    %796 = vmatpush.msra.mxu0 %v774
    %797 = vmatpush.msra.mxu0 %v773
    %798 = vmatpush.msra.mxu0 %v772
    %799 = vmatmul.f32.gmra.mxu0 %v778
    %v800 = vpop.f32.mrf.mxu0
    %v801 = vadd.f32 %v776, %v800
    %802 = vmatmul.f32.gmra.mxu0 %v781
    %v803 = vpop.f32.mrf.mxu0
    %v804 = vadd.f32 %v776, %v803
    %805 = vdwg.mxu0
    %v806 = vmax.f32 %v801, 0.0
    %v807 = vmax.f32 %v804, 0.0
    %v808 = vld [vmem:[%s7] sm:$0xff]
    %v809 = vld [vmem:[%s7 + $0x8] sm:$0xff]
    %v810 = vld [vmem:[%s7 + $0x10] sm:$0xff]
    %v811 = vld [vmem:[%s7 + $0x18] sm:$0xff]
    %v812 = vld [vmem:[%s7 + $0x20] sm:$0xff]
    %v813 = vld [vmem:[%s7 + $0x28] sm:$0xff]
    %v814 = vld [vmem:[%s7 + $0x30] sm:$0xff]
    %v815 = vld [vmem:[%s7 + $0x38] sm:$0xff]
    %v816 = vperm.slane %v65, 5
    %v818 = vsel %vm68, %v806, 0
    %v821 = vsel %vm68, %v807, 0
    %823 = vmatpush.msra.mxu0 0.0
    %824 = vmatpush.msra.mxu0 0.0
    %825 = vmatpush.msra.mxu0 0.0
    %826 = vmatpush.msra.mxu0 0.0
    %827 = vmatpush.msra.mxu0 0.0
    %828 = vmatpush.msra.mxu0 0.0
    %829 = vmatpush.msra.mxu0 0.0
    %830 = vmatpush.msra.mxu0 0.0
    %831 = vmatpush.msra.mxu0 %v815
    %832 = vmatpush.msra.mxu0 %v814
    %833 = vmatpush.msra.mxu0 %v813
    %834 = vmatpush.msra.mxu0 %v812
    %835 = vmatpush.msra.mxu0 %v811
    %836 = vmatpush.msra.mxu0 %v810
    %837 = vmatpush.msra.mxu0 %v809
    %838 = vmatpush.msra.mxu0 %v808
    %839 = vmatmul.f32.gmra.mxu0 %v818
    %v840 = vpop.f32.mrf.mxu0
    %v841 = vadd.f32 %v816, %v840
    %842 = vmatmul.f32.gmra.mxu0 %v821
    %v843 = vpop.f32.mrf.mxu0
    %v844 = vadd.f32 %v816, %v843
    %845 = vdwg.mxu0
    %v846 = vadd.f32 %v720, %v841
    %v847 = vadd.f32 %v721, %v844
    %s848 = scalar_lea.vmem %s8, 8
    %v849 = vld [vmem:[%s848] sm:$0x3f]
    %s850 = scalar_lea.vmem %s2, 16
    %v851 = vld [vmem:[%s850] sm:$0xff]
    %v852 = vld [vmem:[%s850 + $0x8] sm:$0xff]
    %v853 = vadd.f32 %v846, %v851
    %v854 = vadd.f32 %v847, %v852
    %v855 = vsel %vm98, %v853, 0.0
    %856 = vadd.xlane.f32.xlu0 %v855
    %v857 = vpop.xlane.xlu0 %856
    %v858 = vsel %vm98, %v854, 0.0
    %859 = vadd.xlane.f32.xlu0 %v858
    %v860 = vpop.xlane.xlu0 %859
    %v861 = vmul.f32 %v857, %v111
    %v862 = vmul.f32 %v860, %v111
    %v863 = vsub.f32 %v853, %v861
    %v864 = vsub.f32 %v854, %v862
    %v865 = vmul.f32 %v863, %v863
    %v866 = vmul.f32 %v864, %v864
    %v867 = vsel %vm98, %v865, 0.0
    %868 = vadd.xlane.f32.xlu0 %v867
    %v869 = vpop.xlane.xlu0 %868
    %v870 = vsel %vm98, %v866, 0.0
    %871 = vadd.xlane.f32.xlu0 %v870
    %v872 = vpop.xlane.xlu0 %871
    %v873 = vmul.f32 %v869, %v111
    %v874 = vmul.f32 %v872, %v111
    %v875 = vadd.f32 %v873, 1e-06
    %v876 = vadd.f32 %v874, 1e-06
    %v877 = vrsqrt.pop %v875
    %v878 = vmul.f32 %v877, %v875
    %v879 = vmul.f32 %v878, %v877
    %v880 = vmul.f32 0.5, %v879
    %v881 = vsub.f32 1.5, %v880
    %v882 = vmul.f32 %v877, %v881
    %vm883 = vweird.f32 %v875
    %vm884 = vweird.f32 %v877
    %vm885 = vmor %vm883, %vm884
    %v886 = vsel %vm885, %v877, %v882
    %v887 = vrsqrt.pop %v876
    %v888 = vmul.f32 %v887, %v876
    %v889 = vmul.f32 %v888, %v887
    %v890 = vmul.f32 0.5, %v889
    %v891 = vsub.f32 1.5, %v890
    %v892 = vmul.f32 %v887, %v891
    %vm893 = vweird.f32 %v876
    %vm894 = vweird.f32 %v887
    %vm895 = vmor %vm893, %vm894
    %v896 = vsel %vm895, %v887, %v892
    %v897 = vmul.f32 %v863, %v886
    %v898 = vmul.f32 %v864, %v896
    %v899 = vperm.slane %v849, 0
    %v900 = vmul.f32 %v897, %v899
    %v901 = vmul.f32 %v898, %v899
    %v902 = vperm.slane %v849, 1
    %v903 = vadd.f32 %v900, %v902
    %v904 = vadd.f32 %v901, %v902
    %s905 = scalar_lea.vmem %s4, 32
    %v906 = vld [vmem:[%s905] sm:$0xff]
    %v907 = vld [vmem:[%s905 + $0x8] sm:$0xff]
    %v908 = vld [vmem:[%s905 + $0x10] sm:$0xff]
    %v909 = vld [vmem:[%s905 + $0x18] sm:$0xff]
    %v911 = vsel %vm98, %v903, 0
    %v914 = vsel %vm98, %v904, 0
    %916 = vmatpush.msra.mxu0 0.0
    %917 = vmatpush.msra.mxu0 0.0
    %918 = vmatpush.msra.mxu0 0.0
    %919 = vmatpush.msra.mxu0 0.0
    %920 = vmatpush.msra.mxu0 0.0
    %921 = vmatpush.msra.mxu0 0.0
    %922 = vmatpush.msra.mxu0 0.0
    %923 = vmatpush.msra.mxu0 0.0
    %924 = vmatpush.msra.mxu0 0.0
    %925 = vmatpush.msra.mxu0 0.0
    %926 = vmatpush.msra.mxu0 0.0
    %927 = vmatpush.msra.mxu0 0.0
    %928 = vmatpush.msra.mxu0 %v909
    %929 = vmatpush.msra.mxu0 %v908
    %930 = vmatpush.msra.mxu0 %v907
    %931 = vmatpush.msra.mxu0 %v906
    %932 = vmatmul.f32.gmra.mxu0 %v911
    %v933 = vpop.f32.mrf.mxu0
    %v934 = vadd.f32 0.0, %v933
    %935 = vmatmul.f32.gmra.mxu0 %v914
    %v936 = vpop.f32.mrf.mxu0
    %v937 = vadd.f32 0.0, %v936
    %938 = vdwg.mxu0
    %s939 = scalar_lea.vmem %s5, 32
    %v940 = vld [vmem:[%s939] sm:$0xff]
    %v941 = vld [vmem:[%s939 + $0x8] sm:$0xff]
    %v942 = vld [vmem:[%s939 + $0x10] sm:$0xff]
    %v943 = vld [vmem:[%s939 + $0x18] sm:$0xff]
    %944 = vmatpush.msra.mxu0 0.0
    %945 = vmatpush.msra.mxu0 0.0
    %946 = vmatpush.msra.mxu0 0.0
    %947 = vmatpush.msra.mxu0 0.0
    %948 = vmatpush.msra.mxu0 0.0
    %949 = vmatpush.msra.mxu0 0.0
    %950 = vmatpush.msra.mxu0 0.0
    %951 = vmatpush.msra.mxu0 0.0
    %952 = vmatpush.msra.mxu0 0.0
    %953 = vmatpush.msra.mxu0 0.0
    %954 = vmatpush.msra.mxu0 0.0
    %955 = vmatpush.msra.mxu0 0.0
    %956 = vmatpush.msra.mxu0 %v943
    %957 = vmatpush.msra.mxu0 %v942
    %958 = vmatpush.msra.mxu0 %v941
    %959 = vmatpush.msra.mxu0 %v940
    %960 = vmatmul.f32.gmra.mxu0 %v911
    %v961 = vpop.f32.mrf.mxu0
    %v962 = vadd.f32 0.0, %v961
    %963 = vmatmul.f32.gmra.mxu0 %v914
    %v964 = vpop.f32.mrf.mxu0
    %v965 = vadd.f32 0.0, %v964
    %966 = vdwg.mxu0
    %969 = vrot.lane.b32.xlu0 %v934, 96
    %v970 = vpop.permute.xlu0 %969
    %971 = vrot.lane.b32.xlu0 %v937, 96
    %v972 = vpop.permute.xlu0 %971
    %v973 = vsel %vm222, %v934, 0
    %v975 = vsel %vm222, %v937, 0
    %v977 = vsel %vm222, %v970, 0
    %v979 = vsel %vm222, %v972, 0
    %981 = vmatpush.xpose.msra.mxu0 0.0
    %982 = vmatpush.xpose.msra.mxu0 0.0
    %983 = vmatpush.xpose.msra.mxu0 0.0
    %984 = vmatpush.xpose.msra.mxu0 0.0
    %985 = vmatpush.xpose.msra.mxu0 0.0
    %986 = vmatpush.xpose.msra.mxu0 0.0
    %987 = vmatpush.xpose.msra.mxu0 0.0
    %988 = vmatpush.xpose.msra.mxu0 0.0
    %989 = vmatpush.xpose.msra.mxu0 0.0
    %990 = vmatpush.xpose.msra.mxu0 0.0
    %991 = vmatpush.xpose.msra.mxu0 0.0
    %992 = vmatpush.xpose.msra.mxu0 0.0
    %993 = vmatpush.xpose.msra.mxu0 0.0
    %994 = vmatpush.xpose.msra.mxu0 0.0
    %995 = vmatpush.xpose.msra.mxu0 %v979
    %996 = vmatpush.xpose.msra.mxu0 %v977
    %997 = vmatmul.f32.gmra.mxu0 %v973
    %v998 = vpop.f32.mrf.mxu0
    %v999 = vadd.f32 0.0, %v998
    %1000 = vmatmul.f32.gmra.mxu0 %v975
    %v1001 = vpop.f32.mrf.mxu0
    %v1002 = vadd.f32 0.0, %v1001
    %1003 = vdwg.mxu0
    %v1004 = vmul.f32 %v999, 0.35355338
    %v1005 = vmul.f32 %v1002, 0.35355338
    %1006 = vrot.lane.b32.xlu0 %v934, 120
    %v1007 = vpop.permute.xlu0 %1006
    %1008 = vrot.lane.b32.xlu0 %v937, 120
    %v1009 = vpop.permute.xlu0 %1008
    %1010 = vrot.lane.b32.xlu0 %v934, 88
    %v1011 = vpop.permute.xlu0 %1010
    %1012 = vrot.lane.b32.xlu0 %v937, 88
    %v1013 = vpop.permute.xlu0 %1012
    %v1014 = vsel %vm222, %v1007, 0
    %v1016 = vsel %vm222, %v1009, 0
    %v1018 = vsel %vm222, %v1011, 0
    %v1020 = vsel %vm222, %v1013, 0
    %1022 = vmatpush.xpose.msra.mxu0 0.0
    %1023 = vmatpush.xpose.msra.mxu0 0.0
    %1024 = vmatpush.xpose.msra.mxu0 0.0
    %1025 = vmatpush.xpose.msra.mxu0 0.0
    %1026 = vmatpush.xpose.msra.mxu0 0.0
    %1027 = vmatpush.xpose.msra.mxu0 0.0
    %1028 = vmatpush.xpose.msra.mxu0 0.0
    %1029 = vmatpush.xpose.msra.mxu0 0.0
    %1030 = vmatpush.xpose.msra.mxu0 0.0
    %1031 = vmatpush.xpose.msra.mxu0 0.0
    %1032 = vmatpush.xpose.msra.mxu0 0.0
    %1033 = vmatpush.xpose.msra.mxu0 0.0
    %1034 = vmatpush.xpose.msra.mxu0 0.0
    %1035 = vmatpush.xpose.msra.mxu0 0.0
    %1036 = vmatpush.xpose.msra.mxu0 %v1020
    %1037 = vmatpush.xpose.msra.mxu0 %v1018
    %1038 = vmatmul.f32.gmra.mxu0 %v1014
    %v1039 = vpop.f32.mrf.mxu0
    %v1040 = vadd.f32 0.0, %v1039
    %1041 = vmatmul.f32.gmra.mxu0 %v1016
    %v1042 = vpop.f32.mrf.mxu0
    %v1043 = vadd.f32 0.0, %v1042
    %1044 = vdwg.mxu0
    %v1045 = vmul.f32 %v1040, 0.35355338
    %v1046 = vmul.f32 %v1043, 0.35355338
    %1047 = vrot.lane.b32.xlu0 %v934, 112
    %v1048 = vpop.permute.xlu0 %1047
    %1049 = vrot.lane.b32.xlu0 %v937, 112
    %v1050 = vpop.permute.xlu0 %1049
    %1051 = vrot.lane.b32.xlu0 %v934, 80
    %v1052 = vpop.permute.xlu0 %1051
    %1053 = vrot.lane.b32.xlu0 %v937, 80
    %v1054 = vpop.permute.xlu0 %1053
    %v1055 = vsel %vm222, %v1048, 0
    %v1057 = vsel %vm222, %v1050, 0
    %v1059 = vsel %vm222, %v1052, 0
    %v1061 = vsel %vm222, %v1054, 0
    %1063 = vmatpush.xpose.msra.mxu0 0.0
    %1064 = vmatpush.xpose.msra.mxu0 0.0
    %1065 = vmatpush.xpose.msra.mxu0 0.0
    %1066 = vmatpush.xpose.msra.mxu0 0.0
    %1067 = vmatpush.xpose.msra.mxu0 0.0
    %1068 = vmatpush.xpose.msra.mxu0 0.0
    %1069 = vmatpush.xpose.msra.mxu0 0.0
    %1070 = vmatpush.xpose.msra.mxu0 0.0
    %1071 = vmatpush.xpose.msra.mxu0 0.0
    %1072 = vmatpush.xpose.msra.mxu0 0.0
    %1073 = vmatpush.xpose.msra.mxu0 0.0
    %1074 = vmatpush.xpose.msra.mxu0 0.0
    %1075 = vmatpush.xpose.msra.mxu0 0.0
    %1076 = vmatpush.xpose.msra.mxu0 0.0
    %1077 = vmatpush.xpose.msra.mxu0 %v1061
    %1078 = vmatpush.xpose.msra.mxu0 %v1059
    %1079 = vmatmul.f32.gmra.mxu0 %v1055
    %v1080 = vpop.f32.mrf.mxu0
    %v1081 = vadd.f32 0.0, %v1080
    %1082 = vmatmul.f32.gmra.mxu0 %v1057
    %v1083 = vpop.f32.mrf.mxu0
    %v1084 = vadd.f32 0.0, %v1083
    %1085 = vdwg.mxu0
    %v1086 = vmul.f32 %v1081, 0.35355338
    %v1087 = vmul.f32 %v1084, 0.35355338
    %1088 = vrot.lane.b32.xlu0 %v934, 104
    %v1089 = vpop.permute.xlu0 %1088
    %1090 = vrot.lane.b32.xlu0 %v937, 104
    %v1091 = vpop.permute.xlu0 %1090
    %1092 = vrot.lane.b32.xlu0 %v934, 72
    %v1093 = vpop.permute.xlu0 %1092
    %1094 = vrot.lane.b32.xlu0 %v937, 72
    %v1095 = vpop.permute.xlu0 %1094
    %v1096 = vsel %vm222, %v1089, 0
    %v1098 = vsel %vm222, %v1091, 0
    %v1100 = vsel %vm222, %v1093, 0
    %v1102 = vsel %vm222, %v1095, 0
    %1104 = vmatpush.xpose.msra.mxu0 0.0
    %1105 = vmatpush.xpose.msra.mxu0 0.0
    %1106 = vmatpush.xpose.msra.mxu0 0.0
    %1107 = vmatpush.xpose.msra.mxu0 0.0
    %1108 = vmatpush.xpose.msra.mxu0 0.0
    %1109 = vmatpush.xpose.msra.mxu0 0.0
    %1110 = vmatpush.xpose.msra.mxu0 0.0
    %1111 = vmatpush.xpose.msra.mxu0 0.0
    %1112 = vmatpush.xpose.msra.mxu0 0.0
    %1113 = vmatpush.xpose.msra.mxu0 0.0
    %1114 = vmatpush.xpose.msra.mxu0 0.0
    %1115 = vmatpush.xpose.msra.mxu0 0.0
    %1116 = vmatpush.xpose.msra.mxu0 0.0
    %1117 = vmatpush.xpose.msra.mxu0 0.0
    %1118 = vmatpush.xpose.msra.mxu0 %v1102
    %1119 = vmatpush.xpose.msra.mxu0 %v1100
    %1120 = vmatmul.f32.gmra.mxu0 %v1096
    %v1121 = vpop.f32.mrf.mxu0
    %v1122 = vadd.f32 0.0, %v1121
    %1123 = vmatmul.f32.gmra.mxu0 %v1098
    %v1124 = vpop.f32.mrf.mxu0
    %v1125 = vadd.f32 0.0, %v1124
    %1126 = vdwg.mxu0
    %v1127 = vmul.f32 %v1122, 0.35355338
    %v1128 = vmul.f32 %v1125, 0.35355338
    %v1129 = vadd.f32 %v1004, %v57
    %v1130 = vadd.f32 %v1005, %v58
    %v1131 = vadd.f32 %v1045, %v59
    %v1132 = vadd.f32 %v1046, %v60
    %v1133 = vadd.f32 %v1086, %v61
    %v1134 = vadd.f32 %v1087, %v62
    %v1135 = vadd.f32 %v1127, %v63
    %v1136 = vadd.f32 %v1128, %v64
    %v1137 = vsel %vm387, %v1129, -inf
    %1138 = vmax.xlane.f32.xlu0 %v1137
    %v1139 = vpop.xlane.xlu0 %1138
    %v1140 = vsel %vm387, %v1130, -inf
    %1141 = vmax.xlane.f32.xlu0 %v1140
    %v1142 = vpop.xlane.xlu0 %1141
    %v1143 = vsel %vm387, %v1131, -inf
    %1144 = vmax.xlane.f32.xlu0 %v1143
    %v1145 = vpop.xlane.xlu0 %1144
    %v1146 = vsel %vm387, %v1132, -inf
    %1147 = vmax.xlane.f32.xlu0 %v1146
    %v1148 = vpop.xlane.xlu0 %1147
    %v1149 = vsel %vm387, %v1133, -inf
    %1150 = vmax.xlane.f32.xlu0 %v1149
    %v1151 = vpop.xlane.xlu0 %1150
    %v1152 = vsel %vm387, %v1134, -inf
    %1153 = vmax.xlane.f32.xlu0 %v1152
    %v1154 = vpop.xlane.xlu0 %1153
    %v1155 = vsel %vm387, %v1135, -inf
    %1156 = vmax.xlane.f32.xlu0 %v1155
    %v1157 = vpop.xlane.xlu0 %1156
    %v1158 = vsel %vm387, %v1136, -inf
    %1159 = vmax.xlane.f32.xlu0 %v1158
    %v1160 = vpop.xlane.xlu0 %1159
    %v1161 = vsub.f32 %v1129, %v1139
    %v1162 = vsub.f32 %v1130, %v1142
    %v1163 = vsub.f32 %v1131, %v1145
    %v1164 = vsub.f32 %v1132, %v1148
    %v1165 = vsub.f32 %v1133, %v1151
    %v1166 = vsub.f32 %v1134, %v1154
    %v1167 = vsub.f32 %v1135, %v1157
    %v1168 = vsub.f32 %v1136, %v1160
    %v1169 = vmul.f32 %v1161, 1.442695
    %v1170 = vpow.pop %v1169
    %v1171 = vmul.f32 %v1162, 1.442695
    %v1172 = vpow.pop %v1171
    %v1173 = vmul.f32 %v1163, 1.442695
    %v1174 = vpow.pop %v1173
    %v1175 = vmul.f32 %v1164, 1.442695
    %v1176 = vpow.pop %v1175
    %v1177 = vmul.f32 %v1165, 1.442695
    %v1178 = vpow.pop %v1177
    %v1179 = vmul.f32 %v1166, 1.442695
    %v1180 = vpow.pop %v1179
    %v1181 = vmul.f32 %v1167, 1.442695
    %v1182 = vpow.pop %v1181
    %v1183 = vmul.f32 %v1168, 1.442695
    %v1184 = vpow.pop %v1183
    %v1185 = vsel %vm387, %v1170, 0.0
    %1186 = vadd.xlane.f32.xlu0 %v1185
    %v1187 = vpop.xlane.xlu0 %1186
    %v1188 = vsel %vm387, %v1172, 0.0
    %1189 = vadd.xlane.f32.xlu0 %v1188
    %v1190 = vpop.xlane.xlu0 %1189
    %v1191 = vsel %vm387, %v1174, 0.0
    %1192 = vadd.xlane.f32.xlu0 %v1191
    %v1193 = vpop.xlane.xlu0 %1192
    %v1194 = vsel %vm387, %v1176, 0.0
    %1195 = vadd.xlane.f32.xlu0 %v1194
    %v1196 = vpop.xlane.xlu0 %1195
    %v1197 = vsel %vm387, %v1178, 0.0
    %1198 = vadd.xlane.f32.xlu0 %v1197
    %v1199 = vpop.xlane.xlu0 %1198
    %v1200 = vsel %vm387, %v1180, 0.0
    %1201 = vadd.xlane.f32.xlu0 %v1200
    %v1202 = vpop.xlane.xlu0 %1201
    %v1203 = vsel %vm387, %v1182, 0.0
    %1204 = vadd.xlane.f32.xlu0 %v1203
    %v1205 = vpop.xlane.xlu0 %1204
    %v1206 = vsel %vm387, %v1184, 0.0
    %1207 = vadd.xlane.f32.xlu0 %v1206
    %v1208 = vpop.xlane.xlu0 %1207
    %v1209 = vrcp.pop %v1187
    %v1210 = vmul.f32 %v1187, %v1209
    %v1211 = vsub.f32 1.0, %v1210
    %v1212 = vmul.f32 %v1209, %v1211
    %v1213 = vadd.f32 %v1209, %v1212
    %vm1214 = vweird.f32 %v1187
    %vm1215 = vweird.f32 %v1209
    %vm1216 = vmor %vm1214, %vm1215
    %v1217 = vsel %vm1216, %v1209, %v1213
    %v1218 = vand.u32 2147483647, %v1187
    %vm1219 = vcmp.eq.f32.partialorder %v1218, 8.507059e+37
    %v1220 = vand.u32 %v1187, 2147483648
    %v1221 = vor.u32 1.1754944e-38, %v1220
    %v1222 = vsel %vm1219, %v1221, %v1217
    %v1223 = vmul.f32 %v1170, %v1222
    %v1224 = vrcp.pop %v1190
    %v1225 = vmul.f32 %v1190, %v1224
    %v1226 = vsub.f32 1.0, %v1225
    %v1227 = vmul.f32 %v1224, %v1226
    %v1228 = vadd.f32 %v1224, %v1227
    %vm1229 = vweird.f32 %v1190
    %vm1230 = vweird.f32 %v1224
    %vm1231 = vmor %vm1229, %vm1230
    %v1232 = vsel %vm1231, %v1224, %v1228
    %v1233 = vand.u32 2147483647, %v1190
    %vm1234 = vcmp.eq.f32.partialorder %v1233, 8.507059e+37
    %v1235 = vand.u32 %v1190, 2147483648
    %v1236 = vor.u32 1.1754944e-38, %v1235
    %v1237 = vsel %vm1234, %v1236, %v1232
    %v1238 = vmul.f32 %v1172, %v1237
    %v1239 = vrcp.pop %v1193
    %v1240 = vmul.f32 %v1193, %v1239
    %v1241 = vsub.f32 1.0, %v1240
    %v1242 = vmul.f32 %v1239, %v1241
    %v1243 = vadd.f32 %v1239, %v1242
    %vm1244 = vweird.f32 %v1193
    %vm1245 = vweird.f32 %v1239
    %vm1246 = vmor %vm1244, %vm1245
    %v1247 = vsel %vm1246, %v1239, %v1243
    %v1248 = vand.u32 2147483647, %v1193
    %vm1249 = vcmp.eq.f32.partialorder %v1248, 8.507059e+37
    %v1250 = vand.u32 %v1193, 2147483648
    %v1251 = vor.u32 1.1754944e-38, %v1250
    %v1252 = vsel %vm1249, %v1251, %v1247
    %v1253 = vmul.f32 %v1174, %v1252
    %v1254 = vrcp.pop %v1196
    %v1255 = vmul.f32 %v1196, %v1254
    %v1256 = vsub.f32 1.0, %v1255
    %v1257 = vmul.f32 %v1254, %v1256
    %v1258 = vadd.f32 %v1254, %v1257
    %vm1259 = vweird.f32 %v1196
    %vm1260 = vweird.f32 %v1254
    %vm1261 = vmor %vm1259, %vm1260
    %v1262 = vsel %vm1261, %v1254, %v1258
    %v1263 = vand.u32 2147483647, %v1196
    %vm1264 = vcmp.eq.f32.partialorder %v1263, 8.507059e+37
    %v1265 = vand.u32 %v1196, 2147483648
    %v1266 = vor.u32 1.1754944e-38, %v1265
    %v1267 = vsel %vm1264, %v1266, %v1262
    %v1268 = vmul.f32 %v1176, %v1267
    %v1269 = vrcp.pop %v1199
    %v1270 = vmul.f32 %v1199, %v1269
    %v1271 = vsub.f32 1.0, %v1270
    %v1272 = vmul.f32 %v1269, %v1271
    %v1273 = vadd.f32 %v1269, %v1272
    %vm1274 = vweird.f32 %v1199
    %vm1275 = vweird.f32 %v1269
    %vm1276 = vmor %vm1274, %vm1275
    %v1277 = vsel %vm1276, %v1269, %v1273
    %v1278 = vand.u32 2147483647, %v1199
    %vm1279 = vcmp.eq.f32.partialorder %v1278, 8.507059e+37
    %v1280 = vand.u32 %v1199, 2147483648
    %v1281 = vor.u32 1.1754944e-38, %v1280
    %v1282 = vsel %vm1279, %v1281, %v1277
    %v1283 = vmul.f32 %v1178, %v1282
    %v1284 = vrcp.pop %v1202
    %v1285 = vmul.f32 %v1202, %v1284
    %v1286 = vsub.f32 1.0, %v1285
    %v1287 = vmul.f32 %v1284, %v1286
    %v1288 = vadd.f32 %v1284, %v1287
    %vm1289 = vweird.f32 %v1202
    %vm1290 = vweird.f32 %v1284
    %vm1291 = vmor %vm1289, %vm1290
    %v1292 = vsel %vm1291, %v1284, %v1288
    %v1293 = vand.u32 2147483647, %v1202
    %vm1294 = vcmp.eq.f32.partialorder %v1293, 8.507059e+37
    %v1295 = vand.u32 %v1202, 2147483648
    %v1296 = vor.u32 1.1754944e-38, %v1295
    %v1297 = vsel %vm1294, %v1296, %v1292
    %v1298 = vmul.f32 %v1180, %v1297
    %v1299 = vrcp.pop %v1205
    %v1300 = vmul.f32 %v1205, %v1299
    %v1301 = vsub.f32 1.0, %v1300
    %v1302 = vmul.f32 %v1299, %v1301
    %v1303 = vadd.f32 %v1299, %v1302
    %vm1304 = vweird.f32 %v1205
    %vm1305 = vweird.f32 %v1299
    %vm1306 = vmor %vm1304, %vm1305
    %v1307 = vsel %vm1306, %v1299, %v1303
    %v1308 = vand.u32 2147483647, %v1205
    %vm1309 = vcmp.eq.f32.partialorder %v1308, 8.507059e+37
    %v1310 = vand.u32 %v1205, 2147483648
    %v1311 = vor.u32 1.1754944e-38, %v1310
    %v1312 = vsel %vm1309, %v1311, %v1307
    %v1313 = vmul.f32 %v1182, %v1312
    %v1314 = vrcp.pop %v1208
    %v1315 = vmul.f32 %v1208, %v1314
    %v1316 = vsub.f32 1.0, %v1315
    %v1317 = vmul.f32 %v1314, %v1316
    %v1318 = vadd.f32 %v1314, %v1317
    %vm1319 = vweird.f32 %v1208
    %vm1320 = vweird.f32 %v1314
    %vm1321 = vmor %vm1319, %vm1320
    %v1322 = vsel %vm1321, %v1314, %v1318
    %v1323 = vand.u32 2147483647, %v1208
    %vm1324 = vcmp.eq.f32.partialorder %v1323, 8.507059e+37
    %v1325 = vand.u32 %v1208, 2147483648
    %v1326 = vor.u32 1.1754944e-38, %v1325
    %v1327 = vsel %vm1324, %v1326, %v1322
    %v1328 = vmul.f32 %v1184, %v1327
    %1331 = vrot.lane.b32.xlu0 %v962, 96
    %v1332 = vpop.permute.xlu0 %1331
    %1333 = vrot.lane.b32.xlu0 %v965, 96
    %v1334 = vpop.permute.xlu0 %1333
    %v1338 = vsel %vm387, %v1253, 0
    %v1341 = vsel %vm387, %v1268, 0
    %1343 = vmatpush.msra.mxu0 0.0
    %1344 = vmatpush.msra.mxu0 0.0
    %1345 = vmatpush.msra.mxu0 0.0
    %1346 = vmatpush.msra.mxu0 0.0
    %1347 = vmatpush.msra.mxu0 0.0
    %1348 = vmatpush.msra.mxu0 0.0
    %1349 = vmatpush.msra.mxu0 0.0
    %1350 = vmatpush.msra.mxu0 0.0
    %1351 = vmatpush.msra.mxu0 0.0
    %1352 = vmatpush.msra.mxu0 0.0
    %1353 = vmatpush.msra.mxu0 0.0
    %1354 = vmatpush.msra.mxu0 0.0
    %1355 = vmatpush.msra.mxu0 0.0
    %1356 = vmatpush.msra.mxu0 0.0
    %1357 = vmatpush.msra.mxu0 %v1334
    %1358 = vmatpush.msra.mxu0 %v1332
    %1359 = vmatmul.f32.gmra.mxu0 %v1338
    %v1360 = vpop.f32.mrf.mxu0
    %v1361 = vadd.f32 0.0, %v1360
    %1362 = vmatmul.f32.gmra.mxu0 %v1341
    %v1363 = vpop.f32.mrf.mxu0
    %v1364 = vadd.f32 0.0, %v1363
    %1365 = vdwg.mxu0
    %v1367 = vsel %vm387, %v1223, 0
    %v1370 = vsel %vm387, %v1238, 0
    %1372 = vmatpush.msra.mxu0 0.0
    %1373 = vmatpush.msra.mxu0 0.0
    %1374 = vmatpush.msra.mxu0 0.0
    %1375 = vmatpush.msra.mxu0 0.0
    %1376 = vmatpush.msra.mxu0 0.0
    %1377 = vmatpush.msra.mxu0 0.0
    %1378 = vmatpush.msra.mxu0 0.0
    %1379 = vmatpush.msra.mxu0 0.0
    %1380 = vmatpush.msra.mxu0 0.0
    %1381 = vmatpush.msra.mxu0 0.0
    %1382 = vmatpush.msra.mxu0 0.0
    %1383 = vmatpush.msra.mxu0 0.0
    %1384 = vmatpush.msra.mxu0 0.0
    %1385 = vmatpush.msra.mxu0 0.0
    %1386 = vmatpush.msra.mxu0 %v965
    %1387 = vmatpush.msra.mxu0 %v962
    %1388 = vmatmul.f32.gmra.mxu0 %v1367
    %v1389 = vpop.f32.mrf.mxu0
    %v1390 = vadd.f32 %v1361, %v1389
    %1391 = vmatmul.f32.gmra.mxu0 %v1370
    %v1392 = vpop.f32.mrf.mxu0
    %v1393 = vadd.f32 %v1364, %v1392
    %1394 = vdwg.mxu0
    %1395 = vrot.lane.b32.xlu0 %v962, 64
    %v1396 = vpop.permute.xlu0 %1395
    %1397 = vrot.lane.b32.xlu0 %v965, 64
    %v1398 = vpop.permute.xlu0 %1397
    %v1402 = vsel %vm387, %v1283, 0
    %v1405 = vsel %vm387, %v1298, 0
    %1407 = vmatpush.msra.mxu0 0.0
    %1408 = vmatpush.msra.mxu0 0.0
    %1409 = vmatpush.msra.mxu0 0.0
    %1410 = vmatpush.msra.mxu0 0.0
    %1411 = vmatpush.msra.mxu0 0.0
    %1412 = vmatpush.msra.mxu0 0.0
    %1413 = vmatpush.msra.mxu0 0.0
    %1414 = vmatpush.msra.mxu0 0.0
    %1415 = vmatpush.msra.mxu0 0.0
    %1416 = vmatpush.msra.mxu0 0.0
    %1417 = vmatpush.msra.mxu0 0.0
    %1418 = vmatpush.msra.mxu0 0.0
    %1419 = vmatpush.msra.mxu0 0.0
    %1420 = vmatpush.msra.mxu0 0.0
    %1421 = vmatpush.msra.mxu0 %v1398
    %1422 = vmatpush.msra.mxu0 %v1396
    %1423 = vmatmul.f32.gmra.mxu0 %v1402
    %v1424 = vpop.f32.mrf.mxu0
    %v1425 = vadd.f32 0.0, %v1424
    %1426 = vmatmul.f32.gmra.mxu0 %v1405
    %v1427 = vpop.f32.mrf.mxu0
    %v1428 = vadd.f32 0.0, %v1427
    %1429 = vdwg.mxu0
    %v1430 = vadd.f32 %v1390, %v1425
    %v1431 = vadd.f32 %v1393, %v1428
    %1432 = vrot.lane.b32.xlu0 %v962, 32
    %v1433 = vpop.permute.xlu0 %1432
    %1434 = vrot.lane.b32.xlu0 %v965, 32
    %v1435 = vpop.permute.xlu0 %1434
    %v1439 = vsel %vm387, %v1313, 0
    %v1442 = vsel %vm387, %v1328, 0
    %1444 = vmatpush.msra.mxu0 0.0
    %1445 = vmatpush.msra.mxu0 0.0
    %1446 = vmatpush.msra.mxu0 0.0
    %1447 = vmatpush.msra.mxu0 0.0
    %1448 = vmatpush.msra.mxu0 0.0
    %1449 = vmatpush.msra.mxu0 0.0
    %1450 = vmatpush.msra.mxu0 0.0
    %1451 = vmatpush.msra.mxu0 0.0
    %1452 = vmatpush.msra.mxu0 0.0
    %1453 = vmatpush.msra.mxu0 0.0
    %1454 = vmatpush.msra.mxu0 0.0
    %1455 = vmatpush.msra.mxu0 0.0
    %1456 = vmatpush.msra.mxu0 0.0
    %1457 = vmatpush.msra.mxu0 0.0
    %1458 = vmatpush.msra.mxu0 %v1435
    %1459 = vmatpush.msra.mxu0 %v1433
    %1460 = vmatmul.f32.gmra.mxu0 %v1439
    %v1461 = vpop.f32.mrf.mxu0
    %v1462 = vadd.f32 0.0, %v1461
    %1463 = vmatmul.f32.gmra.mxu0 %v1442
    %v1464 = vpop.f32.mrf.mxu0
    %v1465 = vadd.f32 0.0, %v1464
    %1466 = vdwg.mxu0
    %v1467 = vadd.f32 %v1430, %v1462
    %v1468 = vadd.f32 %v1431, %v1465
    %v1469 = vadd.f32 %v853, %v1467
    %v1470 = vadd.f32 %v854, %v1468
    %v1471 = vsel %vm98, %v1469, 0.0
    %1472 = vadd.xlane.f32.xlu0 %v1471
    %v1473 = vpop.xlane.xlu0 %1472
    %v1474 = vsel %vm98, %v1470, 0.0
    %1475 = vadd.xlane.f32.xlu0 %v1474
    %v1476 = vpop.xlane.xlu0 %1475
    %v1477 = vmul.f32 %v1473, %v111
    %v1478 = vmul.f32 %v1476, %v111
    %v1479 = vsub.f32 %v1469, %v1477
    %v1480 = vsub.f32 %v1470, %v1478
    %v1481 = vmul.f32 %v1479, %v1479
    %v1482 = vmul.f32 %v1480, %v1480
    %v1483 = vsel %vm98, %v1481, 0.0
    %1484 = vadd.xlane.f32.xlu0 %v1483
    %v1485 = vpop.xlane.xlu0 %1484
    %v1486 = vsel %vm98, %v1482, 0.0
    %1487 = vadd.xlane.f32.xlu0 %v1486
    %v1488 = vpop.xlane.xlu0 %1487
    %v1489 = vmul.f32 %v1485, %v111
    %v1490 = vmul.f32 %v1488, %v111
    %v1491 = vadd.f32 %v1489, 1e-06
    %v1492 = vadd.f32 %v1490, 1e-06
    %v1493 = vrsqrt.pop %v1491
    %v1494 = vmul.f32 %v1493, %v1491
    %v1495 = vmul.f32 %v1494, %v1493
    %v1496 = vmul.f32 0.5, %v1495
    %v1497 = vsub.f32 1.5, %v1496
    %v1498 = vmul.f32 %v1493, %v1497
    %vm1499 = vweird.f32 %v1491
    %vm1500 = vweird.f32 %v1493
    %vm1501 = vmor %vm1499, %vm1500
    %v1502 = vsel %vm1501, %v1493, %v1498
    %v1503 = vrsqrt.pop %v1492
    %v1504 = vmul.f32 %v1503, %v1492
    %v1505 = vmul.f32 %v1504, %v1503
    %v1506 = vmul.f32 0.5, %v1505
    %v1507 = vsub.f32 1.5, %v1506
    %v1508 = vmul.f32 %v1503, %v1507
    %vm1509 = vweird.f32 %v1492
    %vm1510 = vweird.f32 %v1503
    %vm1511 = vmor %vm1509, %vm1510
    %v1512 = vsel %vm1511, %v1503, %v1508
    %v1513 = vmul.f32 %v1479, %v1502
    %v1514 = vmul.f32 %v1480, %v1512
    %v1515 = vperm.slane %v849, 2
    %v1516 = vmul.f32 %v1513, %v1515
    %v1517 = vmul.f32 %v1514, %v1515
    %v1518 = vperm.slane %v849, 3
    %v1519 = vadd.f32 %v1516, %v1518
    %v1520 = vadd.f32 %v1517, %v1518
    %s1521 = scalar_lea.vmem %s6, 32
    %v1522 = vld [vmem:[%s1521] sm:$0xff]
    %v1523 = vld [vmem:[%s1521 + $0x8] sm:$0xff]
    %v1524 = vld [vmem:[%s1521 + $0x10] sm:$0xff]
    %v1525 = vld [vmem:[%s1521 + $0x18] sm:$0xff]
    %v1526 = vperm.slane %v849, 4
    %v1528 = vsel %vm98, %v1519, 0
    %v1531 = vsel %vm98, %v1520, 0
    %1533 = vmatpush.msra.mxu0 0.0
    %1534 = vmatpush.msra.mxu0 0.0
    %1535 = vmatpush.msra.mxu0 0.0
    %1536 = vmatpush.msra.mxu0 0.0
    %1537 = vmatpush.msra.mxu0 0.0
    %1538 = vmatpush.msra.mxu0 0.0
    %1539 = vmatpush.msra.mxu0 0.0
    %1540 = vmatpush.msra.mxu0 0.0
    %1541 = vmatpush.msra.mxu0 0.0
    %1542 = vmatpush.msra.mxu0 0.0
    %1543 = vmatpush.msra.mxu0 0.0
    %1544 = vmatpush.msra.mxu0 0.0
    %1545 = vmatpush.msra.mxu0 %v1525
    %1546 = vmatpush.msra.mxu0 %v1524
    %1547 = vmatpush.msra.mxu0 %v1523
    %1548 = vmatpush.msra.mxu0 %v1522
    %1549 = vmatmul.f32.gmra.mxu0 %v1528
    %v1550 = vpop.f32.mrf.mxu0
    %v1551 = vadd.f32 %v1526, %v1550
    %1552 = vmatmul.f32.gmra.mxu0 %v1531
    %v1553 = vpop.f32.mrf.mxu0
    %v1554 = vadd.f32 %v1526, %v1553
    %1555 = vdwg.mxu0
    %v1556 = vmax.f32 %v1551, 0.0
    %v1557 = vmax.f32 %v1554, 0.0
    %s1558 = scalar_lea.vmem %s7, 64
    %v1559 = vld [vmem:[%s1558] sm:$0xff]
    %v1560 = vld [vmem:[%s1558 + $0x8] sm:$0xff]
    %v1561 = vld [vmem:[%s1558 + $0x10] sm:$0xff]
    %v1562 = vld [vmem:[%s1558 + $0x18] sm:$0xff]
    %v1563 = vld [vmem:[%s1558 + $0x20] sm:$0xff]
    %v1564 = vld [vmem:[%s1558 + $0x28] sm:$0xff]
    %v1565 = vld [vmem:[%s1558 + $0x30] sm:$0xff]
    %v1566 = vld [vmem:[%s1558 + $0x38] sm:$0xff]
    %v1567 = vperm.slane %v849, 5
    %v1569 = vsel %vm68, %v1556, 0
    %v1572 = vsel %vm68, %v1557, 0
    %1574 = vmatpush.msra.mxu0 0.0
    %1575 = vmatpush.msra.mxu0 0.0
    %1576 = vmatpush.msra.mxu0 0.0
    %1577 = vmatpush.msra.mxu0 0.0
    %1578 = vmatpush.msra.mxu0 0.0
    %1579 = vmatpush.msra.mxu0 0.0
    %1580 = vmatpush.msra.mxu0 0.0
    %1581 = vmatpush.msra.mxu0 0.0
    %1582 = vmatpush.msra.mxu0 %v1566
    %1583 = vmatpush.msra.mxu0 %v1565
    %1584 = vmatpush.msra.mxu0 %v1564
    %1585 = vmatpush.msra.mxu0 %v1563
    %1586 = vmatpush.msra.mxu0 %v1562
    %1587 = vmatpush.msra.mxu0 %v1561
    %1588 = vmatpush.msra.mxu0 %v1560
    %1589 = vmatpush.msra.mxu0 %v1559
    %1590 = vmatmul.f32.gmra.mxu0 %v1569
    %v1591 = vpop.f32.mrf.mxu0
    %v1592 = vadd.f32 %v1567, %v1591
    %1593 = vmatmul.f32.gmra.mxu0 %v1572
    %v1594 = vpop.f32.mrf.mxu0
    %v1595 = vadd.f32 %v1567, %v1594
    %1596 = vdwg.mxu0
    %v1597 = vadd.f32 %v1469, %v1592
    %v1598 = vadd.f32 %v1470, %v1595
    %1599 = vst.msk [vmem:[#allocation2] sm:$0xff] %vm98, %v1597
    %1600 = vst.msk [vmem:[#allocation2 + $0x8] sm:$0xff] %vm98, %v1598
    // Predicated region
    $region38: #{encoder_forward.1} parent=1 // pred_check
      _
    $region39: #{encoder_forward.1} parent=1 // pred_check_branch
      %1602 = sbr.rel (0) target = $region41
    $region40: #{encoder_forward.1} parent=1 // pred_region
      %1604 = vsyncadd [#allocation3], 0
      %s1605 = sshll.u32 [#allocation2], 4
      %s1606 = int_to_ptr.vmem [resolvable:$true] %s1605
      %s1607 = sshll.u32 %s9, 4
      %s1608 = int_to_ptr.hbm [resolvable:$true] %s1607
      %1613 = dma.vmem_to_hbm [thread:$0]  %s1606, 256, %s1608, [#allocation3], 128, 128, 8
    $region41: #{encoder_forward.1} parent=1 // pred_fallthru
      _
    // Predicated region
    $region42: #{encoder_forward.1} parent=1 // pred_check
      _
    $region43: #{encoder_forward.1} parent=1 // pred_check_branch
      %1615 = sbr.rel (0) target = $region45
    $region44: #{encoder_forward.1} parent=1 // pred_region
      %1617 = dma.done [#allocation3], 256
    $region45: #{encoder_forward.1} parent=1 // pred_fallthru
      _
    %1618 = vsyncpa [#allocation3], 1

</llo_original>
